<compile_context>
chip_gen: v5e
topology: v5e:2x2
jax: 0.10.0
libtpu: 0.0.40
codegen_flags: <defaults>
</compile_context>

<pallas_src>
import math
import numpy as np

import jax
import jax.numpy as jnp
from jax.experimental import pallas as pl
from jax.experimental.pallas import tpu as pltpu


# ----------------------------------------------------------------------------
# Pallas kernel: temporal decay + fused GRU cell recurrence + classifier head.
# One grid step processes Tb timesteps; hidden state persists in VMEM scratch.
# ----------------------------------------------------------------------------
def grud_kernel(
    # time-series blocks (B, Tb, F)
    x_ref, m_ref, d_ref, locf_ref,
    # empirical mean (1, F)
    emp_ref,
    # temporal decay params
    wgh_ref, bgh_ref,          # [F, H], [1, H]
    gxd_ref, bgx_ref,          # diag(W_gx) [1, F], [1, F]
    # fused GRU cell params
    wx_ref, wm_ref, wh_ref, b_ref,   # [F,3H], [F,3H], [H,3H], [1,3H]
    whn_ref, bhn_ref,                # [H,H], [1,H]
    # classifier params
    wcls_ref, bcls_ref,        # [H, C], [1, C]
    # output
    out_ref,                   # [B, C]
    # scratch
    h_scr,                     # [B, H] persistent hidden state
):
    tblk = pl.program_id(0)
    f32 = jnp.float32
    H = h_scr.shape[1]

    @pl.when(tblk == 0)
    def _():
        h_scr[...] = jnp.zeros_like(h_scr)

    # Load the whole time block and the (small) parameter tiles once.
    xs = x_ref[...]          # [B, Tb, F]
    ms = m_ref[...]
    ds_ = d_ref[...]
    ls = locf_ref[...]
    Tb = xs.shape[1]

    emp = emp_ref[...]       # [1, F]
    wgh = wgh_ref[...]
    bgh = bgh_ref[...]
    gx_diag = gxd_ref[...]   # [1, F]
    bgx = bgx_ref[...]
    wx = wx_ref[...]
    wm = wm_ref[...]
    wh = wh_ref[...]
    b_fused = b_ref[...]
    whn = whn_ref[...]
    bhn = bhn_ref[...]

    h = h_scr[...]           # [B, H]

    # Static Python loop == full unroll of the recurrence inside one grid step
    # (static indices -> plain static slices; gives the scheduler the whole
    # unrolled window to overlap MXU / VPU / EUP work across timesteps).
    for tt in range(Tb):
        x = xs[:, tt, :]     # [B, F]
        m = ms[:, tt, :]
        d = ds_[:, tt, :]
        xl = ls[:, tt, :]

        # TemporalDecay(h): gamma_h = exp(-relu(d @ W_gh^T + b_gh))
        gamma_h = jnp.exp(-jax.nn.relu(
            jnp.dot(d, wgh, preferred_element_type=f32) + bgh))      # [B, H]
        # TemporalDecay(x) is diagonal -> elementwise, no matmul.
        gamma_x = jnp.exp(-jax.nn.relu(d * gx_diag + bgx))           # [B, F]

        h = h * gamma_h
        x_h = gamma_x * xl + (1.0 - gamma_x) * emp
        x_rep = m * x + (1.0 - m) * x_h

        # Fused gate pre-activations. Mathematically identical to
        # GRUCell(concat([x_rep, h, m]), h): for r/z the i- and h-path weights
        # and biases are folded host-side; n keeps gh_n separate (r * gh_n).
        pre = (jnp.dot(x_rep, wx, preferred_element_type=f32)
               + jnp.dot(m, wm, preferred_element_type=f32)
               + jnp.dot(h, wh, preferred_element_type=f32)
               + b_fused)                                            # [B, 3H]
        gh_n = jnp.dot(h, whn, preferred_element_type=f32) + bhn     # [B, H]

        r = jax.nn.sigmoid(pre[:, :H])
        z = jax.nn.sigmoid(pre[:, H:2 * H])
        n = jnp.tanh(pre[:, 2 * H:] + r * gh_n)
        h = (1.0 - z) * n + z * h

    h_scr[...] = h

    @pl.when(tblk == pl.num_programs(0) - 1)
    def _():
        logits = jnp.dot(h, wcls_ref[...], preferred_element_type=f32) + bcls_ref[...]
        out_ref[...] = jax.nn.sigmoid(logits)


# ----------------------------------------------------------------------------
# Wrapper
# ----------------------------------------------------------------------------
def grud_forward(values, masks, deltas, locf, emp_mean, params, *, time_block=None):
    """values/masks/deltas/locf: [B, T, F] float32; emp_mean: [F].

    `params` is the fused list produced by `pack_kernel_params`.
    """
    B, T, F = values.shape
    H = params[0].shape[1]           # W_gh^T is [F, H]
    C = params[-2].shape[1]          # W_cls^T is [H, C]

    Tb = T if time_block is None else time_block
    assert T % Tb == 0, "time_block must divide T"
    n_blocks = T // Tb

    emp2 = jnp.asarray(emp_mean).reshape(1, F)

    # Index the original [B, T, F] tensors directly along time (no host transposes).
    ts_spec = pl.BlockSpec((B, Tb, F), lambda t: (0, t, 0))

    def full2(a):
        # Constant-index parameter blocks (resident across the whole grid).
        return pl.BlockSpec(a.shape, lambda t: (0, 0))

    in_specs = ([ts_spec] * 4
                + [full2(emp2)]
                + [full2(p) for p in params])

    grid_spec = pltpu.PrefetchScalarGridSpec(
        num_scalar_prefetch=0,
        grid=(n_blocks,),
        in_specs=in_specs,
        out_specs=pl.BlockSpec((B, C), lambda t: (0, 0)),
        scratch_shapes=[pltpu.VMEM((B, H), jnp.float32)],
    )

    return pl.pallas_call(
        grud_kernel,
        out_shape=jax.ShapeDtypeStruct((B, C), jnp.float32),
        grid_spec=grid_spec,
        compiler_params=pltpu.CompilerParams(
            dimension_semantics=("arbitrary",)),   # sequential recurrence over time blocks
    )(values, masks, deltas, locf, emp2, *params)


# ----------------------------------------------------------------------------
# Deterministic parameter init (same shapes / init style as the PyTorch module)
# ----------------------------------------------------------------------------
def init_raw_params(key, F, H, C):
    ks = jax.random.split(key, 10)

    def unif(k, shape, bound):
        return jax.random.uniform(k, shape, jnp.float32, -bound, bound)

    std_h = 1.0 / math.sqrt(H)
    std_f = 1.0 / math.sqrt(F)

    W_gh = unif(ks[0], (H, F), std_h)        # TemporalDecay(h) weights
    b_gh = unif(ks[1], (H,), std_h)
    W_gx = unif(ks[2], (F, F), std_f)        # TemporalDecay(x), diag=True
    b_gx = unif(ks[3], (F,), std_f)
    W_gx_eff = W_gx * jnp.eye(F, dtype=jnp.float32)   # W * identity (diag path)

    std_g = 1.0 / math.sqrt(H)               # nn.GRUCell default init bound
    W_ih = unif(ks[4], (3 * H, 2 * F + H), std_g)
    W_hh = unif(ks[5], (3 * H, H), std_g)
    b_ih = unif(ks[6], (3 * H,), std_g)
    b_hh = unif(ks[7], (3 * H,), std_g)

    W_cls = unif(ks[8], (C, H), 1.0 / math.sqrt(H))
    b_cls = unif(ks[9], (C,), 1.0 / math.sqrt(H))

    return dict(W_gh=W_gh, b_gh=b_gh, W_gx_eff=W_gx_eff, b_gx=b_gx,
                W_ih=W_ih, W_hh=W_hh, b_ih=b_ih, b_hh=b_hh,
                W_cls=W_cls, b_cls=b_cls)


def pack_kernel_params(raw, F, H, C):
    """Transpose / fuse raw PyTorch-layout params into the kernel's layout.

    GRUCell input columns are [x_rep (F) | h (H) | m (F)], gate order r, z, n.
    For the r and z gates the i-path h-block is folded with the h-path weight
    (and the two biases folded); the n gate keeps its h-path (W_hn, b_hn)
    separate because r multiplies it.
    """
    W_ih, W_hh, b_ih, b_hh = raw["W_ih"], raw["W_hh"], raw["b_ih"], raw["b_hh"]

    Wi_r, Wi_z, Wi_n = W_ih[:H], W_ih[H:2 * H], W_ih[2 * H:]
    Wh_r, Wh_z, Wh_n = W_hh[:H], W_hh[H:2 * H], W_hh[2 * H:]

    wx = jnp.concatenate([Wi_r[:, :F].T, Wi_z[:, :F].T, Wi_n[:, :F].T], axis=1)          # [F, 3H]
    wm = jnp.concatenate([Wi_r[:, F + H:].T, Wi_z[:, F + H:].T, Wi_n[:, F + H:].T],
                         axis=1)                                                          # [F, 3H]
    wh = jnp.concatenate([(Wi_r[:, F:F + H] + Wh_r).T,
                          (Wi_z[:, F:F + H] + Wh_z).T,
                          Wi_n[:, F:F + H].T], axis=1)                                    # [H, 3H]
    b_fused = jnp.concatenate([b_ih[:H] + b_hh[:H],
                               b_ih[H:2 * H] + b_hh[H:2 * H],
                               b_ih[2 * H:]]).reshape(1, 3 * H)
    whn = Wh_n.T                                                                          # [H, H]
    bhn = b_hh[2 * H:].reshape(1, H)

    params = [
        raw["W_gh"].T, raw["b_gh"].reshape(1, H),
        jnp.diag(raw["W_gx_eff"]).reshape(1, F), raw["b_gx"].reshape(1, F),
        wx, wm, wh, b_fused, whn, bhn,
        raw["W_cls"].T, raw["b_cls"].reshape(1, C),
    ]
    return params


# ----------------------------------------------------------------------------
# Pure-JAX reference of the PyTorch forward (for correctness check)
# ----------------------------------------------------------------------------
def grud_reference(values, masks, deltas, locf, emp_mean, raw):
    B, T, F = values.shape
    H = raw["W_gh"].shape[0]
    h = jnp.zeros((B, H), jnp.float32)
    for t in range(T):
        x, m, d, xl = values[:, t], masks[:, t], deltas[:, t], locf[:, t]
        gamma_h = jnp.exp(-jax.nn.relu(d @ raw["W_gh"].T + raw["b_gh"]))
        gamma_x = jnp.exp(-jax.nn.relu(d @ raw["W_gx_eff"].T + raw["b_gx"]))
        h = h * gamma_h
        x_h = gamma_x * xl + (1.0 - gamma_x) * emp_mean
        x_rep = m * x + (1.0 - m) * x_h
        inp = jnp.concatenate([x_rep, h, m], axis=1)
        gi = inp @ raw["W_ih"].T + raw["b_ih"]
        gh = h @ raw["W_hh"].T + raw["b_hh"]
        i_r, i_z, i_n = jnp.split(gi, 3, axis=1)
        h_r, h_z, h_n = jnp.split(gh, 3, axis=1)
        r = jax.nn.sigmoid(i_r + h_r)
        z = jax.nn.sigmoid(i_z + h_z)
        n = jnp.tanh(i_n + r * h_n)
        h = (1.0 - z) * n + z * h
    logits = h @ raw["W_cls"].T + raw["b_cls"]
    return jax.nn.sigmoid(logits)


# ----------------------------------------------------------------------------
# Host-side data prep (mirrors the numpy/Dataset glue in `classify`)
# ----------------------------------------------------------------------------
def prepare_inputs(X_np):
    """X_np: [B, T, F] float32 with NaNs for missing values."""
    B, T, F = X_np.shape
    mask = (~np.isnan(X_np)).astype(np.float32)
    values = np.nan_to_num(X_np).astype(np.float32)

    # TODO(synk): DatasetForGRUD is not provided; deltas / empirical_mean follow
    # the standard PyPOTS formulas used by that dataset class.
    deltas = np.zeros_like(values)
    for t in range(1, T):
        deltas[:, t, :] = 1.0 + (1.0 - mask[:, t, :]) * deltas[:, t - 1, :]

    num = (mask * values).sum(axis=(0, 1))
    den = mask.sum(axis=(0, 1))
    emp_mean = np.where(den > 0, num / np.maximum(den, 1.0), 0.0).astype(np.float32)

    # LOCF imputation exactly as in `classify`
    trans_X = X_np.transpose((0, 2, 1))                  # [B, F, T]
    nan_mask = np.isnan(trans_X)
    _, n_rows, n_cols = nan_mask.shape
    idx = np.where(~nan_mask, np.arange(n_cols), 0)
    np.maximum.accumulate(idx, axis=2, out=idx)
    collector = []
    for xx, ii in zip(trans_X, idx):
        collector.append(xx[np.arange(n_rows)[:, None], ii])
    X_imputed = np.asarray(collector).transpose((0, 2, 1))
    X_imputed = np.nan_to_num(X_imputed).astype(np.float32)

    return values, mask, deltas, X_imputed, emp_mean


# ----------------------------------------------------------------------------
# Main
# ----------------------------------------------------------------------------
if __name__ == "__main__":
    B, T, F, H, C = 2, 8, 4, 32, 2   # batch, n_steps, n_features, rnn_hidden, n_classes

    key = jax.random.PRNGKey(0)
    k_data, k_nan, k_param = jax.random.split(key, 3)

    X = jax.random.normal(k_data, (B, T, F), dtype=jnp.float32)
    nan_mask = jax.random.bernoulli(k_nan, 0.2, (B, T, F))
    X = jnp.where(nan_mask, jnp.nan, X)
    X_np = np.asarray(X)

    values, masks, deltas, locf, emp_mean = prepare_inputs(X_np)
    values_j = jnp.asarray(values)
    masks_j = jnp.asarray(masks)
    deltas_j = jnp.asarray(deltas)
    locf_j = jnp.asarray(locf)
    emp_j = jnp.asarray(emp_mean)

    raw = init_raw_params(k_param, F, H, C)
    params = pack_kernel_params(raw, F, H, C)

    pred = grud_forward(values_j, masks_j, deltas_j, locf_j, emp_j, params)
    pred = jax.block_until_ready(pred)

    ref = grud_reference(values_j, masks_j, deltas_j, locf_j, emp_j, raw)
    ref = jax.block_until_ready(ref)

    np.testing.assert_allclose(np.asarray(pred), np.asarray(ref),
                               rtol=1e-4, atol=1e-5)
    print("KERNEL_OK")
</pallas_src>

<mosaic_0001>
module attributes {stable_mosaic.version = 11 : i64} {
  func.func @grud_kernel(%arg0: i32, %arg1: memref<2x8x4xf32, #tpu.memory_space<vmem>>, %arg2: memref<2x8x4xf32, #tpu.memory_space<vmem>>, %arg3: memref<2x8x4xf32, #tpu.memory_space<vmem>>, %arg4: memref<2x8x4xf32, #tpu.memory_space<vmem>>, %arg5: memref<1x4xf32, #tpu.memory_space<vmem>>, %arg6: memref<4x32xf32, #tpu.memory_space<vmem>>, %arg7: memref<1x32xf32, #tpu.memory_space<vmem>>, %arg8: memref<1x4xf32, #tpu.memory_space<vmem>>, %arg9: memref<1x4xf32, #tpu.memory_space<vmem>>, %arg10: memref<4x96xf32, #tpu.memory_space<vmem>>, %arg11: memref<4x96xf32, #tpu.memory_space<vmem>>, %arg12: memref<32x96xf32, #tpu.memory_space<vmem>>, %arg13: memref<1x96xf32, #tpu.memory_space<vmem>>, %arg14: memref<32x32xf32, #tpu.memory_space<vmem>>, %arg15: memref<1x32xf32, #tpu.memory_space<vmem>>, %arg16: memref<32x2xf32, #tpu.memory_space<vmem>>, %arg17: memref<1x2xf32, #tpu.memory_space<vmem>>, %arg18: memref<2x2xf32, #tpu.memory_space<vmem>>, %arg19: memref<2x32xf32, #tpu.memory_space<vmem>>) attributes {dimension_semantics = [#tpu.dimension_semantics<arbitrary>], iteration_bounds = array<i64: 1>, scalar_prefetch = 0 : i64, scratch_operands = 1 : i64, tpu.core_type = #tpu.core_type<tc>, window_params = [{transform_indices = @transform_0, window_bounds = array<i64: 2, 8, 4>}, {transform_indices = @transform_1, window_bounds = array<i64: 2, 8, 4>}, {transform_indices = @transform_2, window_bounds = array<i64: 2, 8, 4>}, {transform_indices = @transform_3, window_bounds = array<i64: 2, 8, 4>}, {pipeline_mode = #tpu.pipeline_mode<synchronous>, transform_indices = @transform_4, window_bounds = array<i64: 1, 4>}, {pipeline_mode = #tpu.pipeline_mode<synchronous>, transform_indices = @transform_5, window_bounds = array<i64: 4, 32>}, {pipeline_mode = #tpu.pipeline_mode<synchronous>, transform_indices = @transform_6, window_bounds = array<i64: 1, 32>}, {pipeline_mode = #tpu.pipeline_mode<synchronous>, transform_indices = @transform_7, window_bounds = array<i64: 1, 4>}, {pipeline_mode = #tpu.pipeline_mode<synchronous>, transform_indices = @transform_8, window_bounds = array<i64: 1, 4>}, {pipeline_mode = #tpu.pipeline_mode<synchronous>, transform_indices = @transform_9, window_bounds = array<i64: 4, 96>}, {pipeline_mode = #tpu.pipeline_mode<synchronous>, transform_indices = @transform_10, window_bounds = array<i64: 4, 96>}, {pipeline_mode = #tpu.pipeline_mode<synchronous>, transform_indices = @transform_11, window_bounds = array<i64: 32, 96>}, {pipeline_mode = #tpu.pipeline_mode<synchronous>, transform_indices = @transform_12, window_bounds = array<i64: 1, 96>}, {pipeline_mode = #tpu.pipeline_mode<synchronous>, transform_indices = @transform_13, window_bounds = array<i64: 32, 32>}, {pipeline_mode = #tpu.pipeline_mode<synchronous>, transform_indices = @transform_14, window_bounds = array<i64: 1, 32>}, {pipeline_mode = #tpu.pipeline_mode<synchronous>, transform_indices = @transform_15, window_bounds = array<i64: 32, 2>}, {pipeline_mode = #tpu.pipeline_mode<synchronous>, transform_indices = @transform_16, window_bounds = array<i64: 1, 2>}, {pipeline_mode = #tpu.pipeline_mode<synchronous>, transform_indices = @transform_17, window_bounds = array<i64: 2, 2>}]} {
    %c0_i32 = arith.constant 0 : i32
    %0 = arith.cmpi eq, %arg0, %c0_i32 : i32
    %1 = arith.extui %0 : i1 to i32
    %c0_i32_0 = arith.constant 0 : i32
    %2 = arith.cmpi ne, %1, %c0_i32_0 : i32
    scf.if %2 {
      %cst_151 = arith.constant 0.000000e+00 : f32
      %567 = vector.broadcast %cst_151 : f32 to vector<2x32xf32>
      %c0_152 = arith.constant 0 : index
      %c0_153 = arith.constant 0 : index
      %568 = vector.load %arg19[%c0_152, %c0_153] : memref<2x32xf32, #tpu.memory_space<vmem>>, vector<2x32xf32>
      tpu.vector_store %arg19[%c0_152, %c0_153], %567 {strides = array<i32>} : memref<2x32xf32, #tpu.memory_space<vmem>>, vector<2x32xf32>,
    } else {
    }
    %c0 = arith.constant 0 : index
    %c0_1 = arith.constant 0 : index
    %c0_2 = arith.constant 0 : index
    %3 = vector.load %arg1[%c0, %c0_1, %c0_2] : memref<2x8x4xf32, #tpu.memory_space<vmem>>, vector<2x8x4xf32>
    %c0_3 = arith.constant 0 : index
    %c0_4 = arith.constant 0 : index
    %c0_5 = arith.constant 0 : index
    %4 = vector.load %arg2[%c0_3, %c0_4, %c0_5] : memref<2x8x4xf32, #tpu.memory_space<vmem>>, vector<2x8x4xf32>
    %c0_6 = arith.constant 0 : index
    %c0_7 = arith.constant 0 : index
    %c0_8 = arith.constant 0 : index
    %5 = vector.load %arg3[%c0_6, %c0_7, %c0_8] : memref<2x8x4xf32, #tpu.memory_space<vmem>>, vector<2x8x4xf32>
    %c0_9 = arith.constant 0 : index
    %c0_10 = arith.constant 0 : index
    %c0_11 = arith.constant 0 : index
    %6 = vector.load %arg4[%c0_9, %c0_10, %c0_11] : memref<2x8x4xf32, #tpu.memory_space<vmem>>, vector<2x8x4xf32>
    %c0_12 = arith.constant 0 : index
    %c0_13 = arith.constant 0 : index
    %7 = vector.load %arg5[%c0_12, %c0_13] : memref<1x4xf32, #tpu.memory_space<vmem>>, vector<1x4xf32>
    %c0_14 = arith.constant 0 : index
    %c0_15 = arith.constant 0 : index
    %8 = vector.load %arg6[%c0_14, %c0_15] : memref<4x32xf32, #tpu.memory_space<vmem>>, vector<4x32xf32>
    %c0_16 = arith.constant 0 : index
    %c0_17 = arith.constant 0 : index
    %9 = vector.load %arg7[%c0_16, %c0_17] : memref<1x32xf32, #tpu.memory_space<vmem>>, vector<1x32xf32>
    %c0_18 = arith.constant 0 : index
    %c0_19 = arith.constant 0 : index
    %10 = vector.load %arg8[%c0_18, %c0_19] : memref<1x4xf32, #tpu.memory_space<vmem>>, vector<1x4xf32>
    %c0_20 = arith.constant 0 : index
    %c0_21 = arith.constant 0 : index
    %11 = vector.load %arg9[%c0_20, %c0_21] : memref<1x4xf32, #tpu.memory_space<vmem>>, vector<1x4xf32>
    %c0_22 = arith.constant 0 : index
    %c0_23 = arith.constant 0 : index
    %12 = vector.load %arg10[%c0_22, %c0_23] : memref<4x96xf32, #tpu.memory_space<vmem>>, vector<4x96xf32>
    %c0_24 = arith.constant 0 : index
    %c0_25 = arith.constant 0 : index
    %13 = vector.load %arg11[%c0_24, %c0_25] : memref<4x96xf32, #tpu.memory_space<vmem>>, vector<4x96xf32>
    %c0_26 = arith.constant 0 : index
    %c0_27 = arith.constant 0 : index
    %14 = vector.load %arg12[%c0_26, %c0_27] : memref<32x96xf32, #tpu.memory_space<vmem>>, vector<32x96xf32>
    %c0_28 = arith.constant 0 : index
    %c0_29 = arith.constant 0 : index
    %15 = vector.load %arg13[%c0_28, %c0_29] : memref<1x96xf32, #tpu.memory_space<vmem>>, vector<1x96xf32>
    %c0_30 = arith.constant 0 : index
    %c0_31 = arith.constant 0 : index
    %16 = vector.load %arg14[%c0_30, %c0_31] : memref<32x32xf32, #tpu.memory_space<vmem>>, vector<32x32xf32>
    %c0_32 = arith.constant 0 : index
    %c0_33 = arith.constant 0 : index
    %17 = vector.load %arg15[%c0_32, %c0_33] : memref<1x32xf32, #tpu.memory_space<vmem>>, vector<1x32xf32>
    %c0_34 = arith.constant 0 : index
    %c0_35 = arith.constant 0 : index
    %18 = vector.load %arg19[%c0_34, %c0_35] : memref<2x32xf32, #tpu.memory_space<vmem>>, vector<2x32xf32>
    %19 = vector.extract_strided_slice %3 {offsets = [0, 0, 0], sizes = [2, 1, 4], strides = [1, 1, 1]} : vector<2x8x4xf32> to vector<2x1x4xf32>
    %20 = vector.shape_cast %19 : vector<2x1x4xf32> to vector<2x4xf32>
    %21 = vector.extract_strided_slice %4 {offsets = [0, 0, 0], sizes = [2, 1, 4], strides = [1, 1, 1]} : vector<2x8x4xf32> to vector<2x1x4xf32>
    %22 = vector.shape_cast %21 : vector<2x1x4xf32> to vector<2x4xf32>
    %23 = vector.extract_strided_slice %5 {offsets = [0, 0, 0], sizes = [2, 1, 4], strides = [1, 1, 1]} : vector<2x8x4xf32> to vector<2x1x4xf32>
    %24 = vector.shape_cast %23 : vector<2x1x4xf32> to vector<2x4xf32>
    %25 = vector.extract_strided_slice %6 {offsets = [0, 0, 0], sizes = [2, 1, 4], strides = [1, 1, 1]} : vector<2x8x4xf32> to vector<2x1x4xf32>
    %26 = vector.shape_cast %25 : vector<2x1x4xf32> to vector<2x4xf32>
    %cst = arith.constant dense<0.000000e+00> : vector<2x32xf32>
    %27 = tpu.matmul %24, %8, %cst {dimension_numbers = #tpu.dot_dimension_numbers<[1], [0], [0], [1], [0, 0, 1, 1], [], []>} : vector<2x4xf32>, vector<4x32xf32>, vector<2x32xf32> -> vector<2x32xf32>
    %28 = vector.broadcast %9 : vector<1x32xf32> to vector<2x32xf32>
    %29 = arith.addf %27, %28 : vector<2x32xf32>
    %cst_36 = arith.constant 0.000000e+00 : f32
    %30 = vector.broadcast %cst_36 : f32 to vector<2x32xf32>
    %31 = arith.maximumf %29, %30 : vector<2x32xf32>
    %cst_37 = arith.constant 0.000000e+00 : f32
    %32 = vector.broadcast %cst_37 : f32 to vector<2x32xf32>
    %33 = arith.subf %32, %31 : vector<2x32xf32>
    %34 = math.exp %33 : vector<2x32xf32>
    %35 = vector.broadcast %10 : vector<1x4xf32> to vector<2x4xf32>
    %36 = arith.mulf %24, %35 : vector<2x4xf32>
    %37 = vector.broadcast %11 : vector<1x4xf32> to vector<2x4xf32>
    %38 = arith.addf %36, %37 : vector<2x4xf32>
    %cst_38 = arith.constant 0.000000e+00 : f32
    %39 = vector.broadcast %cst_38 : f32 to vector<2x4xf32>
    %40 = arith.maximumf %38, %39 : vector<2x4xf32>
    %cst_39 = arith.constant 0.000000e+00 : f32
    %41 = vector.broadcast %cst_39 : f32 to vector<2x4xf32>
    %42 = arith.subf %41, %40 : vector<2x4xf32>
    %43 = math.exp %42 : vector<2x4xf32>
    %44 = arith.mulf %18, %34 : vector<2x32xf32>
    %45 = arith.mulf %43, %26 : vector<2x4xf32>
    %cst_40 = arith.constant 1.000000e+00 : f32
    %46 = vector.broadcast %cst_40 : f32 to vector<2x4xf32>
    %47 = arith.subf %46, %43 : vector<2x4xf32>
    %48 = vector.broadcast %7 : vector<1x4xf32> to vector<2x4xf32>
    %49 = arith.mulf %47, %48 : vector<2x4xf32>
    %50 = arith.addf %45, %49 : vector<2x4xf32>
    %51 = arith.mulf %22, %20 : vector<2x4xf32>
    %cst_41 = arith.constant 1.000000e+00 : f32
    %52 = vector.broadcast %cst_41 : f32 to vector<2x4xf32>
    %53 = arith.subf %52, %22 : vector<2x4xf32>
    %54 = arith.mulf %53, %50 : vector<2x4xf32>
    %55 = arith.addf %51, %54 : vector<2x4xf32>
    %cst_42 = arith.constant dense<0.000000e+00> : vector<2x96xf32>
    %56 = tpu.matmul %55, %12, %cst_42 {dimension_numbers = #tpu.dot_dimension_numbers<[1], [0], [0], [1], [0, 0, 1, 1], [], []>} : vector<2x4xf32>, vector<4x96xf32>, vector<2x96xf32> -> vector<2x96xf32>
    %cst_43 = arith.constant dense<0.000000e+00> : vector<2x96xf32>
    %57 = tpu.matmul %22, %13, %cst_43 {dimension_numbers = #tpu.dot_dimension_numbers<[1], [0], [0], [1], [0, 0, 1, 1], [], []>} : vector<2x4xf32>, vector<4x96xf32>, vector<2x96xf32> -> vector<2x96xf32>
    %58 = arith.addf %56, %57 : vector<2x96xf32>
    %cst_44 = arith.constant dense<0.000000e+00> : vector<2x96xf32>
    %59 = tpu.matmul %44, %14, %cst_44 {dimension_numbers = #tpu.dot_dimension_numbers<[1], [0], [0], [1], [0, 0, 1, 1], [], []>} : vector<2x32xf32>, vector<32x96xf32>, vector<2x96xf32> -> vector<2x96xf32>
    %60 = arith.addf %58, %59 : vector<2x96xf32>
    %61 = vector.broadcast %15 : vector<1x96xf32> to vector<2x96xf32>
    %62 = arith.addf %60, %61 : vector<2x96xf32>
    %cst_45 = arith.constant dense<0.000000e+00> : vector<2x32xf32>
    %63 = tpu.matmul %44, %16, %cst_45 {dimension_numbers = #tpu.dot_dimension_numbers<[1], [0], [0], [1], [0, 0, 1, 1], [], []>} : vector<2x32xf32>, vector<32x32xf32>, vector<2x32xf32> -> vector<2x32xf32>
    %64 = vector.broadcast %17 : vector<1x32xf32> to vector<2x32xf32>
    %65 = arith.addf %63, %64 : vector<2x32xf32>
    %66 = vector.extract_strided_slice %62 {offsets = [0, 0], sizes = [2, 32], strides = [1, 1]} : vector<2x96xf32> to vector<2x32xf32>
    %67 = arith.negf %66 : vector<2x32xf32>
    %68 = math.exp %67 : vector<2x32xf32>
    %cst_46 = arith.constant 1.000000e+00 : f32
    %69 = vector.broadcast %cst_46 : f32 to vector<2x32xf32>
    %70 = arith.addf %69, %68 : vector<2x32xf32>
    %71 = arith.divf %69, %70 : vector<2x32xf32>
    %72 = vector.extract_strided_slice %62 {offsets = [0, 32], sizes = [2, 32], strides = [1, 1]} : vector<2x96xf32> to vector<2x32xf32>
    %73 = arith.negf %72 : vector<2x32xf32>
    %74 = math.exp %73 : vector<2x32xf32>
    %cst_47 = arith.constant 1.000000e+00 : f32
    %75 = vector.broadcast %cst_47 : f32 to vector<2x32xf32>
    %76 = arith.addf %75, %74 : vector<2x32xf32>
    %77 = arith.divf %75, %76 : vector<2x32xf32>
    %78 = vector.extract_strided_slice %62 {offsets = [0, 64], sizes = [2, 32], strides = [1, 1]} : vector<2x96xf32> to vector<2x32xf32>
    %79 = arith.mulf %71, %65 : vector<2x32xf32>
    %80 = arith.addf %78, %79 : vector<2x32xf32>
    %81 = math.tanh %80 : vector<2x32xf32>
    %cst_48 = arith.constant 1.000000e+00 : f32
    %82 = vector.broadcast %cst_48 : f32 to vector<2x32xf32>
    %83 = arith.subf %82, %77 : vector<2x32xf32>
    %84 = arith.mulf %83, %81 : vector<2x32xf32>
    %85 = arith.mulf %77, %44 : vector<2x32xf32>
    %86 = arith.addf %84, %85 : vector<2x32xf32>
    %87 = vector.extract_strided_slice %3 {offsets = [0, 1, 0], sizes = [2, 1, 4], strides = [1, 1, 1]} : vector<2x8x4xf32> to vector<2x1x4xf32>
    %88 = vector.shape_cast %87 : vector<2x1x4xf32> to vector<2x4xf32>
    %89 = vector.extract_strided_slice %4 {offsets = [0, 1, 0], sizes = [2, 1, 4], strides = [1, 1, 1]} : vector<2x8x4xf32> to vector<2x1x4xf32>
    %90 = vector.shape_cast %89 : vector<2x1x4xf32> to vector<2x4xf32>
    %91 = vector.extract_strided_slice %5 {offsets = [0, 1, 0], sizes = [2, 1, 4], strides = [1, 1, 1]} : vector<2x8x4xf32> to vector<2x1x4xf32>
    %92 = vector.shape_cast %91 : vector<2x1x4xf32> to vector<2x4xf32>
    %93 = vector.extract_strided_slice %6 {offsets = [0, 1, 0], sizes = [2, 1, 4], strides = [1, 1, 1]} : vector<2x8x4xf32> to vector<2x1x4xf32>
    %94 = vector.shape_cast %93 : vector<2x1x4xf32> to vector<2x4xf32>
    %cst_49 = arith.constant dense<0.000000e+00> : vector<2x32xf32>
    %95 = tpu.matmul %92, %8, %cst_49 {dimension_numbers = #tpu.dot_dimension_numbers<[1], [0], [0], [1], [0, 0, 1, 1], [], []>} : vector<2x4xf32>, vector<4x32xf32>, vector<2x32xf32> -> vector<2x32xf32>
    %96 = vector.broadcast %9 : vector<1x32xf32> to vector<2x32xf32>
    %97 = arith.addf %95, %96 : vector<2x32xf32>
    %cst_50 = arith.constant 0.000000e+00 : f32
    %98 = vector.broadcast %cst_50 : f32 to vector<2x32xf32>
    %99 = arith.maximumf %97, %98 : vector<2x32xf32>
    %cst_51 = arith.constant 0.000000e+00 : f32
    %100 = vector.broadcast %cst_51 : f32 to vector<2x32xf32>
    %101 = arith.subf %100, %99 : vector<2x32xf32>
    %102 = math.exp %101 : vector<2x32xf32>
    %103 = vector.broadcast %10 : vector<1x4xf32> to vector<2x4xf32>
    %104 = arith.mulf %92, %103 : vector<2x4xf32>
    %105 = vector.broadcast %11 : vector<1x4xf32> to vector<2x4xf32>
    %106 = arith.addf %104, %105 : vector<2x4xf32>
    %cst_52 = arith.constant 0.000000e+00 : f32
    %107 = vector.broadcast %cst_52 : f32 to vector<2x4xf32>
    %108 = arith.maximumf %106, %107 : vector<2x4xf32>
    %cst_53 = arith.constant 0.000000e+00 : f32
    %109 = vector.broadcast %cst_53 : f32 to vector<2x4xf32>
    %110 = arith.subf %109, %108 : vector<2x4xf32>
    %111 = math.exp %110 : vector<2x4xf32>
    %112 = arith.mulf %86, %102 : vector<2x32xf32>
    %113 = arith.mulf %111, %94 : vector<2x4xf32>
    %cst_54 = arith.constant 1.000000e+00 : f32
    %114 = vector.broadcast %cst_54 : f32 to vector<2x4xf32>
    %115 = arith.subf %114, %111 : vector<2x4xf32>
    %116 = vector.broadcast %7 : vector<1x4xf32> to vector<2x4xf32>
    %117 = arith.mulf %115, %116 : vector<2x4xf32>
    %118 = arith.addf %113, %117 : vector<2x4xf32>
    %119 = arith.mulf %90, %88 : vector<2x4xf32>
    %cst_55 = arith.constant 1.000000e+00 : f32
    %120 = vector.broadcast %cst_55 : f32 to vector<2x4xf32>
    %121 = arith.subf %120, %90 : vector<2x4xf32>
    %122 = arith.mulf %121, %118 : vector<2x4xf32>
    %123 = arith.addf %119, %122 : vector<2x4xf32>
    %cst_56 = arith.constant dense<0.000000e+00> : vector<2x96xf32>
    %124 = tpu.matmul %123, %12, %cst_56 {dimension_numbers = #tpu.dot_dimension_numbers<[1], [0], [0], [1], [0, 0, 1, 1], [], []>} : vector<2x4xf32>, vector<4x96xf32>, vector<2x96xf32> -> vector<2x96xf32>
    %cst_57 = arith.constant dense<0.000000e+00> : vector<2x96xf32>
    %125 = tpu.matmul %90, %13, %cst_57 {dimension_numbers = #tpu.dot_dimension_numbers<[1], [0], [0], [1], [0, 0, 1, 1], [], []>} : vector<2x4xf32>, vector<4x96xf32>, vector<2x96xf32> -> vector<2x96xf32>
    %126 = arith.addf %124, %125 : vector<2x96xf32>
    %cst_58 = arith.constant dense<0.000000e+00> : vector<2x96xf32>
    %127 = tpu.matmul %112, %14, %cst_58 {dimension_numbers = #tpu.dot_dimension_numbers<[1], [0], [0], [1], [0, 0, 1, 1], [], []>} : vector<2x32xf32>, vector<32x96xf32>, vector<2x96xf32> -> vector<2x96xf32>
    %128 = arith.addf %126, %127 : vector<2x96xf32>
    %129 = vector.broadcast %15 : vector<1x96xf32> to vector<2x96xf32>
    %130 = arith.addf %128, %129 : vector<2x96xf32>
    %cst_59 = arith.constant dense<0.000000e+00> : vector<2x32xf32>
    %131 = tpu.matmul %112, %16, %cst_59 {dimension_numbers = #tpu.dot_dimension_numbers<[1], [0], [0], [1], [0, 0, 1, 1], [], []>} : vector<2x32xf32>, vector<32x32xf32>, vector<2x32xf32> -> vector<2x32xf32>
    %132 = vector.broadcast %17 : vector<1x32xf32> to vector<2x32xf32>
    %133 = arith.addf %131, %132 : vector<2x32xf32>
    %134 = vector.extract_strided_slice %130 {offsets = [0, 0], sizes = [2, 32], strides = [1, 1]} : vector<2x96xf32> to vector<2x32xf32>
    %135 = arith.negf %134 : vector<2x32xf32>
    %136 = math.exp %135 : vector<2x32xf32>
    %cst_60 = arith.constant 1.000000e+00 : f32
    %137 = vector.broadcast %cst_60 : f32 to vector<2x32xf32>
    %138 = arith.addf %137, %136 : vector<2x32xf32>
    %139 = arith.divf %137, %138 : vector<2x32xf32>
    %140 = vector.extract_strided_slice %130 {offsets = [0, 32], sizes = [2, 32], strides = [1, 1]} : vector<2x96xf32> to vector<2x32xf32>
    %141 = arith.negf %140 : vector<2x32xf32>
    %142 = math.exp %141 : vector<2x32xf32>
    %cst_61 = arith.constant 1.000000e+00 : f32
    %143 = vector.broadcast %cst_61 : f32 to vector<2x32xf32>
    %144 = arith.addf %143, %142 : vector<2x32xf32>
    %145 = arith.divf %143, %144 : vector<2x32xf32>
    %146 = vector.extract_strided_slice %130 {offsets = [0, 64], sizes = [2, 32], strides = [1, 1]} : vector<2x96xf32> to vector<2x32xf32>
    %147 = arith.mulf %139, %133 : vector<2x32xf32>
    %148 = arith.addf %146, %147 : vector<2x32xf32>
    %149 = math.tanh %148 : vector<2x32xf32>
    %cst_62 = arith.constant 1.000000e+00 : f32
    %150 = vector.broadcast %cst_62 : f32 to vector<2x32xf32>
    %151 = arith.subf %150, %145 : vector<2x32xf32>
    %152 = arith.mulf %151, %149 : vector<2x32xf32>
    %153 = arith.mulf %145, %112 : vector<2x32xf32>
    %154 = arith.addf %152, %153 : vector<2x32xf32>
    %155 = vector.extract_strided_slice %3 {offsets = [0, 2, 0], sizes = [2, 1, 4], strides = [1, 1, 1]} : vector<2x8x4xf32> to vector<2x1x4xf32>
    %156 = vector.shape_cast %155 : vector<2x1x4xf32> to vector<2x4xf32>
    %157 = vector.extract_strided_slice %4 {offsets = [0, 2, 0], sizes = [2, 1, 4], strides = [1, 1, 1]} : vector<2x8x4xf32> to vector<2x1x4xf32>
    %158 = vector.shape_cast %157 : vector<2x1x4xf32> to vector<2x4xf32>
    %159 = vector.extract_strided_slice %5 {offsets = [0, 2, 0], sizes = [2, 1, 4], strides = [1, 1, 1]} : vector<2x8x4xf32> to vector<2x1x4xf32>
    %160 = vector.shape_cast %159 : vector<2x1x4xf32> to vector<2x4xf32>
    %161 = vector.extract_strided_slice %6 {offsets = [0, 2, 0], sizes = [2, 1, 4], strides = [1, 1, 1]} : vector<2x8x4xf32> to vector<2x1x4xf32>
    %162 = vector.shape_cast %161 : vector<2x1x4xf32> to vector<2x4xf32>
    %cst_63 = arith.constant dense<0.000000e+00> : vector<2x32xf32>
    %163 = tpu.matmul %160, %8, %cst_63 {dimension_numbers = #tpu.dot_dimension_numbers<[1], [0], [0], [1], [0, 0, 1, 1], [], []>} : vector<2x4xf32>, vector<4x32xf32>, vector<2x32xf32> -> vector<2x32xf32>
    %164 = vector.broadcast %9 : vector<1x32xf32> to vector<2x32xf32>
    %165 = arith.addf %163, %164 : vector<2x32xf32>
    %cst_64 = arith.constant 0.000000e+00 : f32
    %166 = vector.broadcast %cst_64 : f32 to vector<2x32xf32>
    %167 = arith.maximumf %165, %166 : vector<2x32xf32>
    %cst_65 = arith.constant 0.000000e+00 : f32
    %168 = vector.broadcast %cst_65 : f32 to vector<2x32xf32>
    %169 = arith.subf %168, %167 : vector<2x32xf32>
    %170 = math.exp %169 : vector<2x32xf32>
    %171 = vector.broadcast %10 : vector<1x4xf32> to vector<2x4xf32>
    %172 = arith.mulf %160, %171 : vector<2x4xf32>
    %173 = vector.broadcast %11 : vector<1x4xf32> to vector<2x4xf32>
    %174 = arith.addf %172, %173 : vector<2x4xf32>
    %cst_66 = arith.constant 0.000000e+00 : f32
    %175 = vector.broadcast %cst_66 : f32 to vector<2x4xf32>
    %176 = arith.maximumf %174, %175 : vector<2x4xf32>
    %cst_67 = arith.constant 0.000000e+00 : f32
    %177 = vector.broadcast %cst_67 : f32 to vector<2x4xf32>
    %178 = arith.subf %177, %176 : vector<2x4xf32>
    %179 = math.exp %178 : vector<2x4xf32>
    %180 = arith.mulf %154, %170 : vector<2x32xf32>
    %181 = arith.mulf %179, %162 : vector<2x4xf32>
    %cst_68 = arith.constant 1.000000e+00 : f32
    %182 = vector.broadcast %cst_68 : f32 to vector<2x4xf32>
    %183 = arith.subf %182, %179 : vector<2x4xf32>
    %184 = vector.broadcast %7 : vector<1x4xf32> to vector<2x4xf32>
    %185 = arith.mulf %183, %184 : vector<2x4xf32>
    %186 = arith.addf %181, %185 : vector<2x4xf32>
    %187 = arith.mulf %158, %156 : vector<2x4xf32>
    %cst_69 = arith.constant 1.000000e+00 : f32
    %188 = vector.broadcast %cst_69 : f32 to vector<2x4xf32>
    %189 = arith.subf %188, %158 : vector<2x4xf32>
    %190 = arith.mulf %189, %186 : vector<2x4xf32>
    %191 = arith.addf %187, %190 : vector<2x4xf32>
    %cst_70 = arith.constant dense<0.000000e+00> : vector<2x96xf32>
    %192 = tpu.matmul %191, %12, %cst_70 {dimension_numbers = #tpu.dot_dimension_numbers<[1], [0], [0], [1], [0, 0, 1, 1], [], []>} : vector<2x4xf32>, vector<4x96xf32>, vector<2x96xf32> -> vector<2x96xf32>
    %cst_71 = arith.constant dense<0.000000e+00> : vector<2x96xf32>
    %193 = tpu.matmul %158, %13, %cst_71 {dimension_numbers = #tpu.dot_dimension_numbers<[1], [0], [0], [1], [0, 0, 1, 1], [], []>} : vector<2x4xf32>, vector<4x96xf32>, vector<2x96xf32> -> vector<2x96xf32>
    %194 = arith.addf %192, %193 : vector<2x96xf32>
    %cst_72 = arith.constant dense<0.000000e+00> : vector<2x96xf32>
    %195 = tpu.matmul %180, %14, %cst_72 {dimension_numbers = #tpu.dot_dimension_numbers<[1], [0], [0], [1], [0, 0, 1, 1], [], []>} : vector<2x32xf32>, vector<32x96xf32>, vector<2x96xf32> -> vector<2x96xf32>
    %196 = arith.addf %194, %195 : vector<2x96xf32>
    %197 = vector.broadcast %15 : vector<1x96xf32> to vector<2x96xf32>
    %198 = arith.addf %196, %197 : vector<2x96xf32>
    %cst_73 = arith.constant dense<0.000000e+00> : vector<2x32xf32>
    %199 = tpu.matmul %180, %16, %cst_73 {dimension_numbers = #tpu.dot_dimension_numbers<[1], [0], [0], [1], [0, 0, 1, 1], [], []>} : vector<2x32xf32>, vector<32x32xf32>, vector<2x32xf32> -> vector<2x32xf32>
    %200 = vector.broadcast %17 : vector<1x32xf32> to vector<2x32xf32>
    %201 = arith.addf %199, %200 : vector<2x32xf32>
    %202 = vector.extract_strided_slice %198 {offsets = [0, 0], sizes = [2, 32], strides = [1, 1]} : vector<2x96xf32> to vector<2x32xf32>
    %203 = arith.negf %202 : vector<2x32xf32>
    %204 = math.exp %203 : vector<2x32xf32>
    %cst_74 = arith.constant 1.000000e+00 : f32
    %205 = vector.broadcast %cst_74 : f32 to vector<2x32xf32>
    %206 = arith.addf %205, %204 : vector<2x32xf32>
    %207 = arith.divf %205, %206 : vector<2x32xf32>
    %208 = vector.extract_strided_slice %198 {offsets = [0, 32], sizes = [2, 32], strides = [1, 1]} : vector<2x96xf32> to vector<2x32xf32>
    %209 = arith.negf %208 : vector<2x32xf32>
    %210 = math.exp %209 : vector<2x32xf32>
    %cst_75 = arith.constant 1.000000e+00 : f32
    %211 = vector.broadcast %cst_75 : f32 to vector<2x32xf32>
    %212 = arith.addf %211, %210 : vector<2x32xf32>
    %213 = arith.divf %211, %212 : vector<2x32xf32>
    %214 = vector.extract_strided_slice %198 {offsets = [0, 64], sizes = [2, 32], strides = [1, 1]} : vector<2x96xf32> to vector<2x32xf32>
    %215 = arith.mulf %207, %201 : vector<2x32xf32>
    %216 = arith.addf %214, %215 : vector<2x32xf32>
    %217 = math.tanh %216 : vector<2x32xf32>
    %cst_76 = arith.constant 1.000000e+00 : f32
    %218 = vector.broadcast %cst_76 : f32 to vector<2x32xf32>
    %219 = arith.subf %218, %213 : vector<2x32xf32>
    %220 = arith.mulf %219, %217 : vector<2x32xf32>
    %221 = arith.mulf %213, %180 : vector<2x32xf32>
    %222 = arith.addf %220, %221 : vector<2x32xf32>
    %223 = vector.extract_strided_slice %3 {offsets = [0, 3, 0], sizes = [2, 1, 4], strides = [1, 1, 1]} : vector<2x8x4xf32> to vector<2x1x4xf32>
    %224 = vector.shape_cast %223 : vector<2x1x4xf32> to vector<2x4xf32>
    %225 = vector.extract_strided_slice %4 {offsets = [0, 3, 0], sizes = [2, 1, 4], strides = [1, 1, 1]} : vector<2x8x4xf32> to vector<2x1x4xf32>
    %226 = vector.shape_cast %225 : vector<2x1x4xf32> to vector<2x4xf32>
    %227 = vector.extract_strided_slice %5 {offsets = [0, 3, 0], sizes = [2, 1, 4], strides = [1, 1, 1]} : vector<2x8x4xf32> to vector<2x1x4xf32>
    %228 = vector.shape_cast %227 : vector<2x1x4xf32> to vector<2x4xf32>
    %229 = vector.extract_strided_slice %6 {offsets = [0, 3, 0], sizes = [2, 1, 4], strides = [1, 1, 1]} : vector<2x8x4xf32> to vector<2x1x4xf32>
    %230 = vector.shape_cast %229 : vector<2x1x4xf32> to vector<2x4xf32>
    %cst_77 = arith.constant dense<0.000000e+00> : vector<2x32xf32>
    %231 = tpu.matmul %228, %8, %cst_77 {dimension_numbers = #tpu.dot_dimension_numbers<[1], [0], [0], [1], [0, 0, 1, 1], [], []>} : vector<2x4xf32>, vector<4x32xf32>, vector<2x32xf32> -> vector<2x32xf32>
    %232 = vector.broadcast %9 : vector<1x32xf32> to vector<2x32xf32>
    %233 = arith.addf %231, %232 : vector<2x32xf32>
    %cst_78 = arith.constant 0.000000e+00 : f32
    %234 = vector.broadcast %cst_78 : f32 to vector<2x32xf32>
    %235 = arith.maximumf %233, %234 : vector<2x32xf32>
    %cst_79 = arith.constant 0.000000e+00 : f32
    %236 = vector.broadcast %cst_79 : f32 to vector<2x32xf32>
    %237 = arith.subf %236, %235 : vector<2x32xf32>
    %238 = math.exp %237 : vector<2x32xf32>
    %239 = vector.broadcast %10 : vector<1x4xf32> to vector<2x4xf32>
    %240 = arith.mulf %228, %239 : vector<2x4xf32>
    %241 = vector.broadcast %11 : vector<1x4xf32> to vector<2x4xf32>
    %242 = arith.addf %240, %241 : vector<2x4xf32>
    %cst_80 = arith.constant 0.000000e+00 : f32
    %243 = vector.broadcast %cst_80 : f32 to vector<2x4xf32>
    %244 = arith.maximumf %242, %243 : vector<2x4xf32>
    %cst_81 = arith.constant 0.000000e+00 : f32
    %245 = vector.broadcast %cst_81 : f32 to vector<2x4xf32>
    %246 = arith.subf %245, %244 : vector<2x4xf32>
    %247 = math.exp %246 : vector<2x4xf32>
    %248 = arith.mulf %222, %238 : vector<2x32xf32>
    %249 = arith.mulf %247, %230 : vector<2x4xf32>
    %cst_82 = arith.constant 1.000000e+00 : f32
    %250 = vector.broadcast %cst_82 : f32 to vector<2x4xf32>
    %251 = arith.subf %250, %247 : vector<2x4xf32>
    %252 = vector.broadcast %7 : vector<1x4xf32> to vector<2x4xf32>
    %253 = arith.mulf %251, %252 : vector<2x4xf32>
    %254 = arith.addf %249, %253 : vector<2x4xf32>
    %255 = arith.mulf %226, %224 : vector<2x4xf32>
    %cst_83 = arith.constant 1.000000e+00 : f32
    %256 = vector.broadcast %cst_83 : f32 to vector<2x4xf32>
    %257 = arith.subf %256, %226 : vector<2x4xf32>
    %258 = arith.mulf %257, %254 : vector<2x4xf32>
    %259 = arith.addf %255, %258 : vector<2x4xf32>
    %cst_84 = arith.constant dense<0.000000e+00> : vector<2x96xf32>
    %260 = tpu.matmul %259, %12, %cst_84 {dimension_numbers = #tpu.dot_dimension_numbers<[1], [0], [0], [1], [0, 0, 1, 1], [], []>} : vector<2x4xf32>, vector<4x96xf32>, vector<2x96xf32> -> vector<2x96xf32>
    %cst_85 = arith.constant dense<0.000000e+00> : vector<2x96xf32>
    %261 = tpu.matmul %226, %13, %cst_85 {dimension_numbers = #tpu.dot_dimension_numbers<[1], [0], [0], [1], [0, 0, 1, 1], [], []>} : vector<2x4xf32>, vector<4x96xf32>, vector<2x96xf32> -> vector<2x96xf32>
    %262 = arith.addf %260, %261 : vector<2x96xf32>
    %cst_86 = arith.constant dense<0.000000e+00> : vector<2x96xf32>
    %263 = tpu.matmul %248, %14, %cst_86 {dimension_numbers = #tpu.dot_dimension_numbers<[1], [0], [0], [1], [0, 0, 1, 1], [], []>} : vector<2x32xf32>, vector<32x96xf32>, vector<2x96xf32> -> vector<2x96xf32>
    %264 = arith.addf %262, %263 : vector<2x96xf32>
    %265 = vector.broadcast %15 : vector<1x96xf32> to vector<2x96xf32>
    %266 = arith.addf %264, %265 : vector<2x96xf32>
    %cst_87 = arith.constant dense<0.000000e+00> : vector<2x32xf32>
    %267 = tpu.matmul %248, %16, %cst_87 {dimension_numbers = #tpu.dot_dimension_numbers<[1], [0], [0], [1], [0, 0, 1, 1], [], []>} : vector<2x32xf32>, vector<32x32xf32>, vector<2x32xf32> -> vector<2x32xf32>
    %268 = vector.broadcast %17 : vector<1x32xf32> to vector<2x32xf32>
    %269 = arith.addf %267, %268 : vector<2x32xf32>
    %270 = vector.extract_strided_slice %266 {offsets = [0, 0], sizes = [2, 32], strides = [1, 1]} : vector<2x96xf32> to vector<2x32xf32>
    %271 = arith.negf %270 : vector<2x32xf32>
    %272 = math.exp %271 : vector<2x32xf32>
    %cst_88 = arith.constant 1.000000e+00 : f32
    %273 = vector.broadcast %cst_88 : f32 to vector<2x32xf32>
    %274 = arith.addf %273, %272 : vector<2x32xf32>
    %275 = arith.divf %273, %274 : vector<2x32xf32>
    %276 = vector.extract_strided_slice %266 {offsets = [0, 32], sizes = [2, 32], strides = [1, 1]} : vector<2x96xf32> to vector<2x32xf32>
    %277 = arith.negf %276 : vector<2x32xf32>
    %278 = math.exp %277 : vector<2x32xf32>
    %cst_89 = arith.constant 1.000000e+00 : f32
    %279 = vector.broadcast %cst_89 : f32 to vector<2x32xf32>
    %280 = arith.addf %279, %278 : vector<2x32xf32>
    %281 = arith.divf %279, %280 : vector<2x32xf32>
    %282 = vector.extract_strided_slice %266 {offsets = [0, 64], sizes = [2, 32], strides = [1, 1]} : vector<2x96xf32> to vector<2x32xf32>
    %283 = arith.mulf %275, %269 : vector<2x32xf32>
    %284 = arith.addf %282, %283 : vector<2x32xf32>
    %285 = math.tanh %284 : vector<2x32xf32>
    %cst_90 = arith.constant 1.000000e+00 : f32
    %286 = vector.broadcast %cst_90 : f32 to vector<2x32xf32>
    %287 = arith.subf %286, %281 : vector<2x32xf32>
    %288 = arith.mulf %287, %285 : vector<2x32xf32>
    %289 = arith.mulf %281, %248 : vector<2x32xf32>
    %290 = arith.addf %288, %289 : vector<2x32xf32>
    %291 = vector.extract_strided_slice %3 {offsets = [0, 4, 0], sizes = [2, 1, 4], strides = [1, 1, 1]} : vector<2x8x4xf32> to vector<2x1x4xf32>
    %292 = vector.shape_cast %291 : vector<2x1x4xf32> to vector<2x4xf32>
    %293 = vector.extract_strided_slice %4 {offsets = [0, 4, 0], sizes = [2, 1, 4], strides = [1, 1, 1]} : vector<2x8x4xf32> to vector<2x1x4xf32>
    %294 = vector.shape_cast %293 : vector<2x1x4xf32> to vector<2x4xf32>
    %295 = vector.extract_strided_slice %5 {offsets = [0, 4, 0], sizes = [2, 1, 4], strides = [1, 1, 1]} : vector<2x8x4xf32> to vector<2x1x4xf32>
    %296 = vector.shape_cast %295 : vector<2x1x4xf32> to vector<2x4xf32>
    %297 = vector.extract_strided_slice %6 {offsets = [0, 4, 0], sizes = [2, 1, 4], strides = [1, 1, 1]} : vector<2x8x4xf32> to vector<2x1x4xf32>
    %298 = vector.shape_cast %297 : vector<2x1x4xf32> to vector<2x4xf32>
    %cst_91 = arith.constant dense<0.000000e+00> : vector<2x32xf32>
    %299 = tpu.matmul %296, %8, %cst_91 {dimension_numbers = #tpu.dot_dimension_numbers<[1], [0], [0], [1], [0, 0, 1, 1], [], []>} : vector<2x4xf32>, vector<4x32xf32>, vector<2x32xf32> -> vector<2x32xf32>
    %300 = vector.broadcast %9 : vector<1x32xf32> to vector<2x32xf32>
    %301 = arith.addf %299, %300 : vector<2x32xf32>
    %cst_92 = arith.constant 0.000000e+00 : f32
    %302 = vector.broadcast %cst_92 : f32 to vector<2x32xf32>
    %303 = arith.maximumf %301, %302 : vector<2x32xf32>
    %cst_93 = arith.constant 0.000000e+00 : f32
    %304 = vector.broadcast %cst_93 : f32 to vector<2x32xf32>
    %305 = arith.subf %304, %303 : vector<2x32xf32>
    %306 = math.exp %305 : vector<2x32xf32>
    %307 = vector.broadcast %10 : vector<1x4xf32> to vector<2x4xf32>
    %308 = arith.mulf %296, %307 : vector<2x4xf32>
    %309 = vector.broadcast %11 : vector<1x4xf32> to vector<2x4xf32>
    %310 = arith.addf %308, %309 : vector<2x4xf32>
    %cst_94 = arith.constant 0.000000e+00 : f32
    %311 = vector.broadcast %cst_94 : f32 to vector<2x4xf32>
    %312 = arith.maximumf %310, %311 : vector<2x4xf32>
    %cst_95 = arith.constant 0.000000e+00 : f32
    %313 = vector.broadcast %cst_95 : f32 to vector<2x4xf32>
    %314 = arith.subf %313, %312 : vector<2x4xf32>
    %315 = math.exp %314 : vector<2x4xf32>
    %316 = arith.mulf %290, %306 : vector<2x32xf32>
    %317 = arith.mulf %315, %298 : vector<2x4xf32>
    %cst_96 = arith.constant 1.000000e+00 : f32
    %318 = vector.broadcast %cst_96 : f32 to vector<2x4xf32>
    %319 = arith.subf %318, %315 : vector<2x4xf32>
    %320 = vector.broadcast %7 : vector<1x4xf32> to vector<2x4xf32>
    %321 = arith.mulf %319, %320 : vector<2x4xf32>
    %322 = arith.addf %317, %321 : vector<2x4xf32>
    %323 = arith.mulf %294, %292 : vector<2x4xf32>
    %cst_97 = arith.constant 1.000000e+00 : f32
    %324 = vector.broadcast %cst_97 : f32 to vector<2x4xf32>
    %325 = arith.subf %324, %294 : vector<2x4xf32>
    %326 = arith.mulf %325, %322 : vector<2x4xf32>
    %327 = arith.addf %323, %326 : vector<2x4xf32>
    %cst_98 = arith.constant dense<0.000000e+00> : vector<2x96xf32>
    %328 = tpu.matmul %327, %12, %cst_98 {dimension_numbers = #tpu.dot_dimension_numbers<[1], [0], [0], [1], [0, 0, 1, 1], [], []>} : vector<2x4xf32>, vector<4x96xf32>, vector<2x96xf32> -> vector<2x96xf32>
    %cst_99 = arith.constant dense<0.000000e+00> : vector<2x96xf32>
    %329 = tpu.matmul %294, %13, %cst_99 {dimension_numbers = #tpu.dot_dimension_numbers<[1], [0], [0], [1], [0, 0, 1, 1], [], []>} : vector<2x4xf32>, vector<4x96xf32>, vector<2x96xf32> -> vector<2x96xf32>
    %330 = arith.addf %328, %329 : vector<2x96xf32>
    %cst_100 = arith.constant dense<0.000000e+00> : vector<2x96xf32>
    %331 = tpu.matmul %316, %14, %cst_100 {dimension_numbers = #tpu.dot_dimension_numbers<[1], [0], [0], [1], [0, 0, 1, 1], [], []>} : vector<2x32xf32>, vector<32x96xf32>, vector<2x96xf32> -> vector<2x96xf32>
    %332 = arith.addf %330, %331 : vector<2x96xf32>
    %333 = vector.broadcast %15 : vector<1x96xf32> to vector<2x96xf32>
    %334 = arith.addf %332, %333 : vector<2x96xf32>
    %cst_101 = arith.constant dense<0.000000e+00> : vector<2x32xf32>
    %335 = tpu.matmul %316, %16, %cst_101 {dimension_numbers = #tpu.dot_dimension_numbers<[1], [0], [0], [1], [0, 0, 1, 1], [], []>} : vector<2x32xf32>, vector<32x32xf32>, vector<2x32xf32> -> vector<2x32xf32>
    %336 = vector.broadcast %17 : vector<1x32xf32> to vector<2x32xf32>
    %337 = arith.addf %335, %336 : vector<2x32xf32>
    %338 = vector.extract_strided_slice %334 {offsets = [0, 0], sizes = [2, 32], strides = [1, 1]} : vector<2x96xf32> to vector<2x32xf32>
    %339 = arith.negf %338 : vector<2x32xf32>
    %340 = math.exp %339 : vector<2x32xf32>
    %cst_102 = arith.constant 1.000000e+00 : f32
    %341 = vector.broadcast %cst_102 : f32 to vector<2x32xf32>
    %342 = arith.addf %341, %340 : vector<2x32xf32>
    %343 = arith.divf %341, %342 : vector<2x32xf32>
    %344 = vector.extract_strided_slice %334 {offsets = [0, 32], sizes = [2, 32], strides = [1, 1]} : vector<2x96xf32> to vector<2x32xf32>
    %345 = arith.negf %344 : vector<2x32xf32>
    %346 = math.exp %345 : vector<2x32xf32>
    %cst_103 = arith.constant 1.000000e+00 : f32
    %347 = vector.broadcast %cst_103 : f32 to vector<2x32xf32>
    %348 = arith.addf %347, %346 : vector<2x32xf32>
    %349 = arith.divf %347, %348 : vector<2x32xf32>
    %350 = vector.extract_strided_slice %334 {offsets = [0, 64], sizes = [2, 32], strides = [1, 1]} : vector<2x96xf32> to vector<2x32xf32>
    %351 = arith.mulf %343, %337 : vector<2x32xf32>
    %352 = arith.addf %350, %351 : vector<2x32xf32>
    %353 = math.tanh %352 : vector<2x32xf32>
    %cst_104 = arith.constant 1.000000e+00 : f32
    %354 = vector.broadcast %cst_104 : f32 to vector<2x32xf32>
    %355 = arith.subf %354, %349 : vector<2x32xf32>
    %356 = arith.mulf %355, %353 : vector<2x32xf32>
    %357 = arith.mulf %349, %316 : vector<2x32xf32>
    %358 = arith.addf %356, %357 : vector<2x32xf32>
    %359 = vector.extract_strided_slice %3 {offsets = [0, 5, 0], sizes = [2, 1, 4], strides = [1, 1, 1]} : vector<2x8x4xf32> to vector<2x1x4xf32>
    %360 = vector.shape_cast %359 : vector<2x1x4xf32> to vector<2x4xf32>
    %361 = vector.extract_strided_slice %4 {offsets = [0, 5, 0], sizes = [2, 1, 4], strides = [1, 1, 1]} : vector<2x8x4xf32> to vector<2x1x4xf32>
    %362 = vector.shape_cast %361 : vector<2x1x4xf32> to vector<2x4xf32>
    %363 = vector.extract_strided_slice %5 {offsets = [0, 5, 0], sizes = [2, 1, 4], strides = [1, 1, 1]} : vector<2x8x4xf32> to vector<2x1x4xf32>
    %364 = vector.shape_cast %363 : vector<2x1x4xf32> to vector<2x4xf32>
    %365 = vector.extract_strided_slice %6 {offsets = [0, 5, 0], sizes = [2, 1, 4], strides = [1, 1, 1]} : vector<2x8x4xf32> to vector<2x1x4xf32>
    %366 = vector.shape_cast %365 : vector<2x1x4xf32> to vector<2x4xf32>
    %cst_105 = arith.constant dense<0.000000e+00> : vector<2x32xf32>
    %367 = tpu.matmul %364, %8, %cst_105 {dimension_numbers = #tpu.dot_dimension_numbers<[1], [0], [0], [1], [0, 0, 1, 1], [], []>} : vector<2x4xf32>, vector<4x32xf32>, vector<2x32xf32> -> vector<2x32xf32>
    %368 = vector.broadcast %9 : vector<1x32xf32> to vector<2x32xf32>
    %369 = arith.addf %367, %368 : vector<2x32xf32>
    %cst_106 = arith.constant 0.000000e+00 : f32
    %370 = vector.broadcast %cst_106 : f32 to vector<2x32xf32>
    %371 = arith.maximumf %369, %370 : vector<2x32xf32>
    %cst_107 = arith.constant 0.000000e+00 : f32
    %372 = vector.broadcast %cst_107 : f32 to vector<2x32xf32>
    %373 = arith.subf %372, %371 : vector<2x32xf32>
    %374 = math.exp %373 : vector<2x32xf32>
    %375 = vector.broadcast %10 : vector<1x4xf32> to vector<2x4xf32>
    %376 = arith.mulf %364, %375 : vector<2x4xf32>
    %377 = vector.broadcast %11 : vector<1x4xf32> to vector<2x4xf32>
    %378 = arith.addf %376, %377 : vector<2x4xf32>
    %cst_108 = arith.constant 0.000000e+00 : f32
    %379 = vector.broadcast %cst_108 : f32 to vector<2x4xf32>
    %380 = arith.maximumf %378, %379 : vector<2x4xf32>
    %cst_109 = arith.constant 0.000000e+00 : f32
    %381 = vector.broadcast %cst_109 : f32 to vector<2x4xf32>
    %382 = arith.subf %381, %380 : vector<2x4xf32>
    %383 = math.exp %382 : vector<2x4xf32>
    %384 = arith.mulf %358, %374 : vector<2x32xf32>
    %385 = arith.mulf %383, %366 : vector<2x4xf32>
    %cst_110 = arith.constant 1.000000e+00 : f32
    %386 = vector.broadcast %cst_110 : f32 to vector<2x4xf32>
    %387 = arith.subf %386, %383 : vector<2x4xf32>
    %388 = vector.broadcast %7 : vector<1x4xf32> to vector<2x4xf32>
    %389 = arith.mulf %387, %388 : vector<2x4xf32>
    %390 = arith.addf %385, %389 : vector<2x4xf32>
    %391 = arith.mulf %362, %360 : vector<2x4xf32>
    %cst_111 = arith.constant 1.000000e+00 : f32
    %392 = vector.broadcast %cst_111 : f32 to vector<2x4xf32>
    %393 = arith.subf %392, %362 : vector<2x4xf32>
    %394 = arith.mulf %393, %390 : vector<2x4xf32>
    %395 = arith.addf %391, %394 : vector<2x4xf32>
    %cst_112 = arith.constant dense<0.000000e+00> : vector<2x96xf32>
    %396 = tpu.matmul %395, %12, %cst_112 {dimension_numbers = #tpu.dot_dimension_numbers<[1], [0], [0], [1], [0, 0, 1, 1], [], []>} : vector<2x4xf32>, vector<4x96xf32>, vector<2x96xf32> -> vector<2x96xf32>
    %cst_113 = arith.constant dense<0.000000e+00> : vector<2x96xf32>
    %397 = tpu.matmul %362, %13, %cst_113 {dimension_numbers = #tpu.dot_dimension_numbers<[1], [0], [0], [1], [0, 0, 1, 1], [], []>} : vector<2x4xf32>, vector<4x96xf32>, vector<2x96xf32> -> vector<2x96xf32>
    %398 = arith.addf %396, %397 : vector<2x96xf32>
    %cst_114 = arith.constant dense<0.000000e+00> : vector<2x96xf32>
    %399 = tpu.matmul %384, %14, %cst_114 {dimension_numbers = #tpu.dot_dimension_numbers<[1], [0], [0], [1], [0, 0, 1, 1], [], []>} : vector<2x32xf32>, vector<32x96xf32>, vector<2x96xf32> -> vector<2x96xf32>
    %400 = arith.addf %398, %399 : vector<2x96xf32>
    %401 = vector.broadcast %15 : vector<1x96xf32> to vector<2x96xf32>
    %402 = arith.addf %400, %401 : vector<2x96xf32>
    %cst_115 = arith.constant dense<0.000000e+00> : vector<2x32xf32>
    %403 = tpu.matmul %384, %16, %cst_115 {dimension_numbers = #tpu.dot_dimension_numbers<[1], [0], [0], [1], [0, 0, 1, 1], [], []>} : vector<2x32xf32>, vector<32x32xf32>, vector<2x32xf32> -> vector<2x32xf32>
    %404 = vector.broadcast %17 : vector<1x32xf32> to vector<2x32xf32>
    %405 = arith.addf %403, %404 : vector<2x32xf32>
    %406 = vector.extract_strided_slice %402 {offsets = [0, 0], sizes = [2, 32], strides = [1, 1]} : vector<2x96xf32> to vector<2x32xf32>
    %407 = arith.negf %406 : vector<2x32xf32>
    %408 = math.exp %407 : vector<2x32xf32>
    %cst_116 = arith.constant 1.000000e+00 : f32
    %409 = vector.broadcast %cst_116 : f32 to vector<2x32xf32>
    %410 = arith.addf %409, %408 : vector<2x32xf32>
    %411 = arith.divf %409, %410 : vector<2x32xf32>
    %412 = vector.extract_strided_slice %402 {offsets = [0, 32], sizes = [2, 32], strides = [1, 1]} : vector<2x96xf32> to vector<2x32xf32>
    %413 = arith.negf %412 : vector<2x32xf32>
    %414 = math.exp %413 : vector<2x32xf32>
    %cst_117 = arith.constant 1.000000e+00 : f32
    %415 = vector.broadcast %cst_117 : f32 to vector<2x32xf32>
    %416 = arith.addf %415, %414 : vector<2x32xf32>
    %417 = arith.divf %415, %416 : vector<2x32xf32>
    %418 = vector.extract_strided_slice %402 {offsets = [0, 64], sizes = [2, 32], strides = [1, 1]} : vector<2x96xf32> to vector<2x32xf32>
    %419 = arith.mulf %411, %405 : vector<2x32xf32>
    %420 = arith.addf %418, %419 : vector<2x32xf32>
    %421 = math.tanh %420 : vector<2x32xf32>
    %cst_118 = arith.constant 1.000000e+00 : f32
    %422 = vector.broadcast %cst_118 : f32 to vector<2x32xf32>
    %423 = arith.subf %422, %417 : vector<2x32xf32>
    %424 = arith.mulf %423, %421 : vector<2x32xf32>
    %425 = arith.mulf %417, %384 : vector<2x32xf32>
    %426 = arith.addf %424, %425 : vector<2x32xf32>
    %427 = vector.extract_strided_slice %3 {offsets = [0, 6, 0], sizes = [2, 1, 4], strides = [1, 1, 1]} : vector<2x8x4xf32> to vector<2x1x4xf32>
    %428 = vector.shape_cast %427 : vector<2x1x4xf32> to vector<2x4xf32>
    %429 = vector.extract_strided_slice %4 {offsets = [0, 6, 0], sizes = [2, 1, 4], strides = [1, 1, 1]} : vector<2x8x4xf32> to vector<2x1x4xf32>
    %430 = vector.shape_cast %429 : vector<2x1x4xf32> to vector<2x4xf32>
    %431 = vector.extract_strided_slice %5 {offsets = [0, 6, 0], sizes = [2, 1, 4], strides = [1, 1, 1]} : vector<2x8x4xf32> to vector<2x1x4xf32>
    %432 = vector.shape_cast %431 : vector<2x1x4xf32> to vector<2x4xf32>
    %433 = vector.extract_strided_slice %6 {offsets = [0, 6, 0], sizes = [2, 1, 4], strides = [1, 1, 1]} : vector<2x8x4xf32> to vector<2x1x4xf32>
    %434 = vector.shape_cast %433 : vector<2x1x4xf32> to vector<2x4xf32>
    %cst_119 = arith.constant dense<0.000000e+00> : vector<2x32xf32>
    %435 = tpu.matmul %432, %8, %cst_119 {dimension_numbers = #tpu.dot_dimension_numbers<[1], [0], [0], [1], [0, 0, 1, 1], [], []>} : vector<2x4xf32>, vector<4x32xf32>, vector<2x32xf32> -> vector<2x32xf32>
    %436 = vector.broadcast %9 : vector<1x32xf32> to vector<2x32xf32>
    %437 = arith.addf %435, %436 : vector<2x32xf32>
    %cst_120 = arith.constant 0.000000e+00 : f32
    %438 = vector.broadcast %cst_120 : f32 to vector<2x32xf32>
    %439 = arith.maximumf %437, %438 : vector<2x32xf32>
    %cst_121 = arith.constant 0.000000e+00 : f32
    %440 = vector.broadcast %cst_121 : f32 to vector<2x32xf32>
    %441 = arith.subf %440, %439 : vector<2x32xf32>
    %442 = math.exp %441 : vector<2x32xf32>
    %443 = vector.broadcast %10 : vector<1x4xf32> to vector<2x4xf32>
    %444 = arith.mulf %432, %443 : vector<2x4xf32>
    %445 = vector.broadcast %11 : vector<1x4xf32> to vector<2x4xf32>
    %446 = arith.addf %444, %445 : vector<2x4xf32>
    %cst_122 = arith.constant 0.000000e+00 : f32
    %447 = vector.broadcast %cst_122 : f32 to vector<2x4xf32>
    %448 = arith.maximumf %446, %447 : vector<2x4xf32>
    %cst_123 = arith.constant 0.000000e+00 : f32
    %449 = vector.broadcast %cst_123 : f32 to vector<2x4xf32>
    %450 = arith.subf %449, %448 : vector<2x4xf32>
    %451 = math.exp %450 : vector<2x4xf32>
    %452 = arith.mulf %426, %442 : vector<2x32xf32>
    %453 = arith.mulf %451, %434 : vector<2x4xf32>
    %cst_124 = arith.constant 1.000000e+00 : f32
    %454 = vector.broadcast %cst_124 : f32 to vector<2x4xf32>
    %455 = arith.subf %454, %451 : vector<2x4xf32>
    %456 = vector.broadcast %7 : vector<1x4xf32> to vector<2x4xf32>
    %457 = arith.mulf %455, %456 : vector<2x4xf32>
    %458 = arith.addf %453, %457 : vector<2x4xf32>
    %459 = arith.mulf %430, %428 : vector<2x4xf32>
    %cst_125 = arith.constant 1.000000e+00 : f32
    %460 = vector.broadcast %cst_125 : f32 to vector<2x4xf32>
    %461 = arith.subf %460, %430 : vector<2x4xf32>
    %462 = arith.mulf %461, %458 : vector<2x4xf32>
    %463 = arith.addf %459, %462 : vector<2x4xf32>
    %cst_126 = arith.constant dense<0.000000e+00> : vector<2x96xf32>
    %464 = tpu.matmul %463, %12, %cst_126 {dimension_numbers = #tpu.dot_dimension_numbers<[1], [0], [0], [1], [0, 0, 1, 1], [], []>} : vector<2x4xf32>, vector<4x96xf32>, vector<2x96xf32> -> vector<2x96xf32>
    %cst_127 = arith.constant dense<0.000000e+00> : vector<2x96xf32>
    %465 = tpu.matmul %430, %13, %cst_127 {dimension_numbers = #tpu.dot_dimension_numbers<[1], [0], [0], [1], [0, 0, 1, 1], [], []>} : vector<2x4xf32>, vector<4x96xf32>, vector<2x96xf32> -> vector<2x96xf32>
    %466 = arith.addf %464, %465 : vector<2x96xf32>
    %cst_128 = arith.constant dense<0.000000e+00> : vector<2x96xf32>
    %467 = tpu.matmul %452, %14, %cst_128 {dimension_numbers = #tpu.dot_dimension_numbers<[1], [0], [0], [1], [0, 0, 1, 1], [], []>} : vector<2x32xf32>, vector<32x96xf32>, vector<2x96xf32> -> vector<2x96xf32>
    %468 = arith.addf %466, %467 : vector<2x96xf32>
    %469 = vector.broadcast %15 : vector<1x96xf32> to vector<2x96xf32>
    %470 = arith.addf %468, %469 : vector<2x96xf32>
    %cst_129 = arith.constant dense<0.000000e+00> : vector<2x32xf32>
    %471 = tpu.matmul %452, %16, %cst_129 {dimension_numbers = #tpu.dot_dimension_numbers<[1], [0], [0], [1], [0, 0, 1, 1], [], []>} : vector<2x32xf32>, vector<32x32xf32>, vector<2x32xf32> -> vector<2x32xf32>
    %472 = vector.broadcast %17 : vector<1x32xf32> to vector<2x32xf32>
    %473 = arith.addf %471, %472 : vector<2x32xf32>
    %474 = vector.extract_strided_slice %470 {offsets = [0, 0], sizes = [2, 32], strides = [1, 1]} : vector<2x96xf32> to vector<2x32xf32>
    %475 = arith.negf %474 : vector<2x32xf32>
    %476 = math.exp %475 : vector<2x32xf32>
    %cst_130 = arith.constant 1.000000e+00 : f32
    %477 = vector.broadcast %cst_130 : f32 to vector<2x32xf32>
    %478 = arith.addf %477, %476 : vector<2x32xf32>
    %479 = arith.divf %477, %478 : vector<2x32xf32>
    %480 = vector.extract_strided_slice %470 {offsets = [0, 32], sizes = [2, 32], strides = [1, 1]} : vector<2x96xf32> to vector<2x32xf32>
    %481 = arith.negf %480 : vector<2x32xf32>
    %482 = math.exp %481 : vector<2x32xf32>
    %cst_131 = arith.constant 1.000000e+00 : f32
    %483 = vector.broadcast %cst_131 : f32 to vector<2x32xf32>
    %484 = arith.addf %483, %482 : vector<2x32xf32>
    %485 = arith.divf %483, %484 : vector<2x32xf32>
    %486 = vector.extract_strided_slice %470 {offsets = [0, 64], sizes = [2, 32], strides = [1, 1]} : vector<2x96xf32> to vector<2x32xf32>
    %487 = arith.mulf %479, %473 : vector<2x32xf32>
    %488 = arith.addf %486, %487 : vector<2x32xf32>
    %489 = math.tanh %488 : vector<2x32xf32>
    %cst_132 = arith.constant 1.000000e+00 : f32
    %490 = vector.broadcast %cst_132 : f32 to vector<2x32xf32>
    %491 = arith.subf %490, %485 : vector<2x32xf32>
    %492 = arith.mulf %491, %489 : vector<2x32xf32>
    %493 = arith.mulf %485, %452 : vector<2x32xf32>
    %494 = arith.addf %492, %493 : vector<2x32xf32>
    %495 = vector.extract_strided_slice %3 {offsets = [0, 7, 0], sizes = [2, 1, 4], strides = [1, 1, 1]} : vector<2x8x4xf32> to vector<2x1x4xf32>
    %496 = vector.shape_cast %495 : vector<2x1x4xf32> to vector<2x4xf32>
    %497 = vector.extract_strided_slice %4 {offsets = [0, 7, 0], sizes = [2, 1, 4], strides = [1, 1, 1]} : vector<2x8x4xf32> to vector<2x1x4xf32>
    %498 = vector.shape_cast %497 : vector<2x1x4xf32> to vector<2x4xf32>
    %499 = vector.extract_strided_slice %5 {offsets = [0, 7, 0], sizes = [2, 1, 4], strides = [1, 1, 1]} : vector<2x8x4xf32> to vector<2x1x4xf32>
    %500 = vector.shape_cast %499 : vector<2x1x4xf32> to vector<2x4xf32>
    %501 = vector.extract_strided_slice %6 {offsets = [0, 7, 0], sizes = [2, 1, 4], strides = [1, 1, 1]} : vector<2x8x4xf32> to vector<2x1x4xf32>
    %502 = vector.shape_cast %501 : vector<2x1x4xf32> to vector<2x4xf32>
    %cst_133 = arith.constant dense<0.000000e+00> : vector<2x32xf32>
    %503 = tpu.matmul %500, %8, %cst_133 {dimension_numbers = #tpu.dot_dimension_numbers<[1], [0], [0], [1], [0, 0, 1, 1], [], []>} : vector<2x4xf32>, vector<4x32xf32>, vector<2x32xf32> -> vector<2x32xf32>
    %504 = vector.broadcast %9 : vector<1x32xf32> to vector<2x32xf32>
    %505 = arith.addf %503, %504 : vector<2x32xf32>
    %cst_134 = arith.constant 0.000000e+00 : f32
    %506 = vector.broadcast %cst_134 : f32 to vector<2x32xf32>
    %507 = arith.maximumf %505, %506 : vector<2x32xf32>
    %cst_135 = arith.constant 0.000000e+00 : f32
    %508 = vector.broadcast %cst_135 : f32 to vector<2x32xf32>
    %509 = arith.subf %508, %507 : vector<2x32xf32>
    %510 = math.exp %509 : vector<2x32xf32>
    %511 = vector.broadcast %10 : vector<1x4xf32> to vector<2x4xf32>
    %512 = arith.mulf %500, %511 : vector<2x4xf32>
    %513 = vector.broadcast %11 : vector<1x4xf32> to vector<2x4xf32>
    %514 = arith.addf %512, %513 : vector<2x4xf32>
    %cst_136 = arith.constant 0.000000e+00 : f32
    %515 = vector.broadcast %cst_136 : f32 to vector<2x4xf32>
    %516 = arith.maximumf %514, %515 : vector<2x4xf32>
    %cst_137 = arith.constant 0.000000e+00 : f32
    %517 = vector.broadcast %cst_137 : f32 to vector<2x4xf32>
    %518 = arith.subf %517, %516 : vector<2x4xf32>
    %519 = math.exp %518 : vector<2x4xf32>
    %520 = arith.mulf %494, %510 : vector<2x32xf32>
    %521 = arith.mulf %519, %502 : vector<2x4xf32>
    %cst_138 = arith.constant 1.000000e+00 : f32
    %522 = vector.broadcast %cst_138 : f32 to vector<2x4xf32>
    %523 = arith.subf %522, %519 : vector<2x4xf32>
    %524 = vector.broadcast %7 : vector<1x4xf32> to vector<2x4xf32>
    %525 = arith.mulf %523, %524 : vector<2x4xf32>
    %526 = arith.addf %521, %525 : vector<2x4xf32>
    %527 = arith.mulf %498, %496 : vector<2x4xf32>
    %cst_139 = arith.constant 1.000000e+00 : f32
    %528 = vector.broadcast %cst_139 : f32 to vector<2x4xf32>
    %529 = arith.subf %528, %498 : vector<2x4xf32>
    %530 = arith.mulf %529, %526 : vector<2x4xf32>
    %531 = arith.addf %527, %530 : vector<2x4xf32>
    %cst_140 = arith.constant dense<0.000000e+00> : vector<2x96xf32>
    %532 = tpu.matmul %531, %12, %cst_140 {dimension_numbers = #tpu.dot_dimension_numbers<[1], [0], [0], [1], [0, 0, 1, 1], [], []>} : vector<2x4xf32>, vector<4x96xf32>, vector<2x96xf32> -> vector<2x96xf32>
    %cst_141 = arith.constant dense<0.000000e+00> : vector<2x96xf32>
    %533 = tpu.matmul %498, %13, %cst_141 {dimension_numbers = #tpu.dot_dimension_numbers<[1], [0], [0], [1], [0, 0, 1, 1], [], []>} : vector<2x4xf32>, vector<4x96xf32>, vector<2x96xf32> -> vector<2x96xf32>
    %534 = arith.addf %532, %533 : vector<2x96xf32>
    %cst_142 = arith.constant dense<0.000000e+00> : vector<2x96xf32>
    %535 = tpu.matmul %520, %14, %cst_142 {dimension_numbers = #tpu.dot_dimension_numbers<[1], [0], [0], [1], [0, 0, 1, 1], [], []>} : vector<2x32xf32>, vector<32x96xf32>, vector<2x96xf32> -> vector<2x96xf32>
    %536 = arith.addf %534, %535 : vector<2x96xf32>
    %537 = vector.broadcast %15 : vector<1x96xf32> to vector<2x96xf32>
    %538 = arith.addf %536, %537 : vector<2x96xf32>
    %cst_143 = arith.constant dense<0.000000e+00> : vector<2x32xf32>
    %539 = tpu.matmul %520, %16, %cst_143 {dimension_numbers = #tpu.dot_dimension_numbers<[1], [0], [0], [1], [0, 0, 1, 1], [], []>} : vector<2x32xf32>, vector<32x32xf32>, vector<2x32xf32> -> vector<2x32xf32>
    %540 = vector.broadcast %17 : vector<1x32xf32> to vector<2x32xf32>
    %541 = arith.addf %539, %540 : vector<2x32xf32>
    %542 = vector.extract_strided_slice %538 {offsets = [0, 0], sizes = [2, 32], strides = [1, 1]} : vector<2x96xf32> to vector<2x32xf32>
    %543 = arith.negf %542 : vector<2x32xf32>
    %544 = math.exp %543 : vector<2x32xf32>
    %cst_144 = arith.constant 1.000000e+00 : f32
    %545 = vector.broadcast %cst_144 : f32 to vector<2x32xf32>
    %546 = arith.addf %545, %544 : vector<2x32xf32>
    %547 = arith.divf %545, %546 : vector<2x32xf32>
    %548 = vector.extract_strided_slice %538 {offsets = [0, 32], sizes = [2, 32], strides = [1, 1]} : vector<2x96xf32> to vector<2x32xf32>
    %549 = arith.negf %548 : vector<2x32xf32>
    %550 = math.exp %549 : vector<2x32xf32>
    %cst_145 = arith.constant 1.000000e+00 : f32
    %551 = vector.broadcast %cst_145 : f32 to vector<2x32xf32>
    %552 = arith.addf %551, %550 : vector<2x32xf32>
    %553 = arith.divf %551, %552 : vector<2x32xf32>
    %554 = vector.extract_strided_slice %538 {offsets = [0, 64], sizes = [2, 32], strides = [1, 1]} : vector<2x96xf32> to vector<2x32xf32>
    %555 = arith.mulf %547, %541 : vector<2x32xf32>
    %556 = arith.addf %554, %555 : vector<2x32xf32>
    %557 = math.tanh %556 : vector<2x32xf32>
    %cst_146 = arith.constant 1.000000e+00 : f32
    %558 = vector.broadcast %cst_146 : f32 to vector<2x32xf32>
    %559 = arith.subf %558, %553 : vector<2x32xf32>
    %560 = arith.mulf %559, %557 : vector<2x32xf32>
    %561 = arith.mulf %553, %520 : vector<2x32xf32>
    %562 = arith.addf %560, %561 : vector<2x32xf32>
    %c0_147 = arith.constant 0 : index
    %c0_148 = arith.constant 0 : index
    %563 = vector.load %arg19[%c0_147, %c0_148] : memref<2x32xf32, #tpu.memory_space<vmem>>, vector<2x32xf32>
    tpu.vector_store %arg19[%c0_147, %c0_148], %562 {strides = array<i32>} : memref<2x32xf32, #tpu.memory_space<vmem>>, vector<2x32xf32>,
    %c0_i32_149 = arith.constant 0 : i32
    %564 = arith.cmpi eq, %arg0, %c0_i32_149 : i32
    %565 = arith.extui %564 : i1 to i32
    %c0_i32_150 = arith.constant 0 : i32
    %566 = arith.cmpi ne, %565, %c0_i32_150 : i32
    scf.if %566 {
      %c0_151 = arith.constant 0 : index
      %c0_152 = arith.constant 0 : index
      %567 = vector.load %arg16[%c0_151, %c0_152] : memref<32x2xf32, #tpu.memory_space<vmem>>, vector<32x2xf32>
      %cst_153 = arith.constant dense<0.000000e+00> : vector<2x2xf32>
      %568 = tpu.matmul %562, %567, %cst_153 {dimension_numbers = #tpu.dot_dimension_numbers<[1], [0], [0], [1], [0, 0, 1, 1], [], []>} : vector<2x32xf32>, vector<32x2xf32>, vector<2x2xf32> -> vector<2x2xf32>
      %c0_154 = arith.constant 0 : index
      %c0_155 = arith.constant 0 : index
      %569 = vector.load %arg17[%c0_154, %c0_155] : memref<1x2xf32, #tpu.memory_space<vmem>>, vector<1x2xf32>
      %570 = vector.broadcast %569 : vector<1x2xf32> to vector<2x2xf32>
      %571 = arith.addf %568, %570 : vector<2x2xf32>
      %572 = arith.negf %571 : vector<2x2xf32>
      %573 = math.exp %572 : vector<2x2xf32>
      %cst_156 = arith.constant 1.000000e+00 : f32
      %574 = vector.broadcast %cst_156 : f32 to vector<2x2xf32>
      %575 = arith.addf %574, %573 : vector<2x2xf32>
      %576 = arith.divf %574, %575 : vector<2x2xf32>
      %c0_157 = arith.constant 0 : index
      %c0_158 = arith.constant 0 : index
      %577 = vector.load %arg18[%c0_157, %c0_158] : memref<2x2xf32, #tpu.memory_space<vmem>>, vector<2x2xf32>
      tpu.vector_store %arg18[%c0_157, %c0_158], %576 {strides = array<i32>} : memref<2x2xf32, #tpu.memory_space<vmem>>, vector<2x2xf32>,
    } else {
    }
    return
  }
  func.func @transform_0(%arg0: i32) -> (i32, i32, i32) {
    %c0_i32 = arith.constant 0 : i32
    %c0_i32_0 = arith.constant 0 : i32
    %c0_i32_1 = arith.constant 0 : i32
    return %c0_i32, %arg0, %c0_i32_0 : i32, i32, i32
  }
  func.func @transform_1(%arg0: i32) -> (i32, i32, i32) {
    %c0_i32 = arith.constant 0 : i32
    %c0_i32_0 = arith.constant 0 : i32
    %c0_i32_1 = arith.constant 0 : i32
    return %c0_i32, %arg0, %c0_i32_0 : i32, i32, i32
  }
  func.func @transform_2(%arg0: i32) -> (i32, i32, i32) {
    %c0_i32 = arith.constant 0 : i32
    %c0_i32_0 = arith.constant 0 : i32
    %c0_i32_1 = arith.constant 0 : i32
    return %c0_i32, %arg0, %c0_i32_0 : i32, i32, i32
  }
  func.func @transform_3(%arg0: i32) -> (i32, i32, i32) {
    %c0_i32 = arith.constant 0 : i32
    %c0_i32_0 = arith.constant 0 : i32
    %c0_i32_1 = arith.constant 0 : i32
    return %c0_i32, %arg0, %c0_i32_0 : i32, i32, i32
  }
  func.func @transform_4(%arg0: i32) -> (i32, i32) {
    %c0_i32 = arith.constant 0 : i32
    %c0_i32_0 = arith.constant 0 : i32
    %c0_i32_1 = arith.constant 0 : i32
    return %c0_i32, %c0_i32_0 : i32, i32
  }
  func.func @transform_5(%arg0: i32) -> (i32, i32) {
    %c0_i32 = arith.constant 0 : i32
    %c0_i32_0 = arith.constant 0 : i32
    %c0_i32_1 = arith.constant 0 : i32
    return %c0_i32, %c0_i32_0 : i32, i32
  }
  func.func @transform_6(%arg0: i32) -> (i32, i32) {
    %c0_i32 = arith.constant 0 : i32
    %c0_i32_0 = arith.constant 0 : i32
    %c0_i32_1 = arith.constant 0 : i32
    return %c0_i32, %c0_i32_0 : i32, i32
  }
  func.func @transform_7(%arg0: i32) -> (i32, i32) {
    %c0_i32 = arith.constant 0 : i32
    %c0_i32_0 = arith.constant 0 : i32
    %c0_i32_1 = arith.constant 0 : i32
    return %c0_i32, %c0_i32_0 : i32, i32
  }
  func.func @transform_8(%arg0: i32) -> (i32, i32) {
    %c0_i32 = arith.constant 0 : i32
    %c0_i32_0 = arith.constant 0 : i32
    %c0_i32_1 = arith.constant 0 : i32
    return %c0_i32, %c0_i32_0 : i32, i32
  }
  func.func @transform_9(%arg0: i32) -> (i32, i32) {
    %c0_i32 = arith.constant 0 : i32
    %c0_i32_0 = arith.constant 0 : i32
    %c0_i32_1 = arith.constant 0 : i32
    return %c0_i32, %c0_i32_0 : i32, i32
  }
  func.func @transform_10(%arg0: i32) -> (i32, i32) {
    %c0_i32 = arith.constant 0 : i32
    %c0_i32_0 = arith.constant 0 : i32
    %c0_i32_1 = arith.constant 0 : i32
    return %c0_i32, %c0_i32_0 : i32, i32
  }
  func.func @transform_11(%arg0: i32) -> (i32, i32) {
    %c0_i32 = arith.constant 0 : i32
    %c0_i32_0 = arith.constant 0 : i32
    %c0_i32_1 = arith.constant 0 : i32
    return %c0_i32, %c0_i32_0 : i32, i32
  }
  func.func @transform_12(%arg0: i32) -> (i32, i32) {
    %c0_i32 = arith.constant 0 : i32
    %c0_i32_0 = arith.constant 0 : i32
    %c0_i32_1 = arith.constant 0 : i32
    return %c0_i32, %c0_i32_0 : i32, i32
  }
  func.func @transform_13(%arg0: i32) -> (i32, i32) {
    %c0_i32 = arith.constant 0 : i32
    %c0_i32_0 = arith.constant 0 : i32
    %c0_i32_1 = arith.constant 0 : i32
    return %c0_i32, %c0_i32_0 : i32, i32
  }
  func.func @transform_14(%arg0: i32) -> (i32, i32) {
    %c0_i32 = arith.constant 0 : i32
    %c0_i32_0 = arith.constant 0 : i32
    %c0_i32_1 = arith.constant 0 : i32
    return %c0_i32, %c0_i32_0 : i32, i32
  }
  func.func @transform_15(%arg0: i32) -> (i32, i32) {
    %c0_i32 = arith.constant 0 : i32
    %c0_i32_0 = arith.constant 0 : i32
    %c0_i32_1 = arith.constant 0 : i32
    return %c0_i32, %c0_i32_0 : i32, i32
  }
  func.func @transform_16(%arg0: i32) -> (i32, i32) {
    %c0_i32 = arith.constant 0 : i32
    %c0_i32_0 = arith.constant 0 : i32
    %c0_i32_1 = arith.constant 0 : i32
    return %c0_i32, %c0_i32_0 : i32, i32
  }
  func.func @transform_17(%arg0: i32) -> (i32, i32) {
    %c0_i32 = arith.constant 0 : i32
    %c0_i32_0 = arith.constant 0 : i32
    %c0_i32_1 = arith.constant 0 : i32
    return %c0_i32, %c0_i32_0 : i32, i32
  }
}

</mosaic_0001>

<llo_original>
// kernel: tpu_custom_call.1
$region0: #{tpu_custom_call.1}
  #allocation0 [shape = 'u32[]', space=smem, size = 0x4, offset = 0x4, fixed_abs, tag = 'smem constant byte address 0x4 - core index']
  #allocation1 [shape = 'u32[72,128]{1,0:T(1,128)}', space=vmem, size = 0x9000, scoped, tag = 'internal scratch']
  #allocation2 [shape = 'f32[2,32]{1,0:T(2,128)}', space=vmem, size = 0x400, scoped, tag = 'scratch operand']
  %s0 = inlined_call_operand.vmem [shape: f32[2,8,4], index: 0, kind: input, shape index: {}]
  %s1 = inlined_call_operand.vmem [shape: f32[2,8,4], index: 1, kind: input, shape index: {}]
  %s2 = inlined_call_operand.vmem [shape: f32[2,8,4], index: 2, kind: input, shape index: {}]
  %s3 = inlined_call_operand.vmem [shape: f32[2,8,4], index: 3, kind: input, shape index: {}]
  %s4 = inlined_call_operand.vmem [shape: f32[1,4], index: 4, kind: input, shape index: {}]
  %s5 = inlined_call_operand.vmem [shape: f32[4,32], index: 5, kind: input, shape index: {}]
  %s6 = inlined_call_operand.vmem [shape: f32[1,32], index: 6, kind: input, shape index: {}]
  %s7 = inlined_call_operand.vmem [shape: f32[1,4], index: 7, kind: input, shape index: {}]
  %s8 = inlined_call_operand.vmem [shape: f32[1,4], index: 8, kind: input, shape index: {}]
  %s9 = inlined_call_operand.vmem [shape: f32[4,96], index: 9, kind: input, shape index: {}]
  %s10 = inlined_call_operand.vmem [shape: f32[4,96], index: 10, kind: input, shape index: {}]
  %s11 = inlined_call_operand.vmem [shape: f32[32,96], index: 11, kind: input, shape index: {}]
  %s12 = inlined_call_operand.vmem [shape: f32[1,96], index: 12, kind: input, shape index: {}]
  %s13 = inlined_call_operand.vmem [shape: f32[32,32], index: 13, kind: input, shape index: {}]
  %s14 = inlined_call_operand.vmem [shape: f32[1,32], index: 14, kind: input, shape index: {}]
  %s15 = inlined_call_operand.vmem [shape: f32[32,2], index: 15, kind: input, shape index: {}]
  %s16 = inlined_call_operand.vmem [shape: f32[1,2], index: 16, kind: input, shape index: {}]
  %s17 = inlined_call_operand.hbm [shape: f32[2,2], index: 17, kind: output, shape index: {}]
  %s18 = sld [smem:[#allocation0]]
  $region86: #{tpu_custom_call.1} parent=0
    _
  %s20 = ssub.s32 1, %s18
  %s21 = scalar_select 0, %s20, %s18
  $region1: #{tpu_custom_call.1} parent=0
    #allocation3 [shape = 'u8[1024]{0}', space=vmem, size = 0x400, scoped, tag = 'output window, operand 0, single buffered']
    #allocation4 [shape = 's32[1]{0}', space=sflag, size = 0x4, scoped, tag = 'scoped memory for tpu_custom_call.1']
    %22 = vsyncpa [#allocation4], 0
    // Predicated region
    $region2: #{tpu_custom_call.1} parent=1 // pred_check
      _
    $region3: #{tpu_custom_call.1} parent=1 // pred_check_branch
      %24 = sbr.rel (0) target = $region5
    $region4: #{tpu_custom_call.1} parent=1 // pred_region
      _
    $region5: #{tpu_custom_call.1} parent=1 // pred_fallthru
      _
    // Predicated region
    $region6: #{tpu_custom_call.1} parent=1 // pred_check
      _
    $region7: #{tpu_custom_call.1} parent=1 // pred_check_branch
      %26 = sbr.rel (0) target = $region9
    $region8: #{tpu_custom_call.1} parent=1 // pred_region
      _
    $region9: #{tpu_custom_call.1} parent=1 // pred_fallthru
      _
    // Predicated region
    $region10: #{tpu_custom_call.1} parent=1 // pred_check
      _
    $region11: #{tpu_custom_call.1} parent=1 // pred_check_branch
      %28 = sbr.rel (0) target = $region13
    $region12: #{tpu_custom_call.1} parent=1 // pred_region
      _
    $region13: #{tpu_custom_call.1} parent=1 // pred_fallthru
      _
    // Predicated region
    $region14: #{tpu_custom_call.1} parent=1 // pred_check
      _
    $region15: #{tpu_custom_call.1} parent=1 // pred_check_branch
      %30 = sbr.rel (0) target = $region17
    $region16: #{tpu_custom_call.1} parent=1 // pred_region
      _
    $region17: #{tpu_custom_call.1} parent=1 // pred_fallthru
      _
    // Predicated region
    $region18: #{tpu_custom_call.1} parent=1 // pred_check
      _
    $region19: #{tpu_custom_call.1} parent=1 // pred_check_branch
      %32 = sbr.rel (0) target = $region21
    $region20: #{tpu_custom_call.1} parent=1 // pred_region
      _
    $region21: #{tpu_custom_call.1} parent=1 // pred_fallthru
      _
    // Predicated region
    $region22: #{tpu_custom_call.1} parent=1 // pred_check
      _
    $region23: #{tpu_custom_call.1} parent=1 // pred_check_branch
      %34 = sbr.rel (0) target = $region25
    $region24: #{tpu_custom_call.1} parent=1 // pred_region
      _
    $region25: #{tpu_custom_call.1} parent=1 // pred_fallthru
      _
    // Predicated region
    $region26: #{tpu_custom_call.1} parent=1 // pred_check
      _
    $region27: #{tpu_custom_call.1} parent=1 // pred_check_branch
      %36 = sbr.rel (0) target = $region29
    $region28: #{tpu_custom_call.1} parent=1 // pred_region
      _
    $region29: #{tpu_custom_call.1} parent=1 // pred_fallthru
      _
    // Predicated region
    $region30: #{tpu_custom_call.1} parent=1 // pred_check
      _
    $region31: #{tpu_custom_call.1} parent=1 // pred_check_branch
      %38 = sbr.rel (0) target = $region33
    $region32: #{tpu_custom_call.1} parent=1 // pred_region
      _
    $region33: #{tpu_custom_call.1} parent=1 // pred_fallthru
      _
    // Predicated region
    $region34: #{tpu_custom_call.1} parent=1 // pred_check
      _
    $region35: #{tpu_custom_call.1} parent=1 // pred_check_branch
      %40 = sbr.rel (0) target = $region37
    $region36: #{tpu_custom_call.1} parent=1 // pred_region
      _
    $region37: #{tpu_custom_call.1} parent=1 // pred_fallthru
      _
    // Predicated region
    $region38: #{tpu_custom_call.1} parent=1 // pred_check
      _
    $region39: #{tpu_custom_call.1} parent=1 // pred_check_branch
      %42 = sbr.rel (0) target = $region41
    $region40: #{tpu_custom_call.1} parent=1 // pred_region
      _
    $region41: #{tpu_custom_call.1} parent=1 // pred_fallthru
      _
    // Predicated region
    $region42: #{tpu_custom_call.1} parent=1 // pred_check
      _
    $region43: #{tpu_custom_call.1} parent=1 // pred_check_branch
      %44 = sbr.rel (0) target = $region45
    $region44: #{tpu_custom_call.1} parent=1 // pred_region
      _
    $region45: #{tpu_custom_call.1} parent=1 // pred_fallthru
      _
    // Predicated region
    $region46: #{tpu_custom_call.1} parent=1 // pred_check
      _
    $region47: #{tpu_custom_call.1} parent=1 // pred_check_branch
      %46 = sbr.rel (0) target = $region49
    $region48: #{tpu_custom_call.1} parent=1 // pred_region
      _
    $region49: #{tpu_custom_call.1} parent=1 // pred_fallthru
      _
    // Predicated region
    $region50: #{tpu_custom_call.1} parent=1 // pred_check
      _
    $region51: #{tpu_custom_call.1} parent=1 // pred_check_branch
      %48 = sbr.rel (0) target = $region53
    $region52: #{tpu_custom_call.1} parent=1 // pred_region
      _
    $region53: #{tpu_custom_call.1} parent=1 // pred_fallthru
      _
    // Predicated region
    $region54: #{tpu_custom_call.1} parent=1 // pred_check
      _
    $region55: #{tpu_custom_call.1} parent=1 // pred_check_branch
      %50 = sbr.rel (0) target = $region57
    $region56: #{tpu_custom_call.1} parent=1 // pred_region
      _
    $region57: #{tpu_custom_call.1} parent=1 // pred_fallthru
      _
    // Predicated region
    $region58: #{tpu_custom_call.1} parent=1 // pred_check
      _
    $region59: #{tpu_custom_call.1} parent=1 // pred_check_branch
      %52 = sbr.rel (0) target = $region61
    $region60: #{tpu_custom_call.1} parent=1 // pred_region
      _
    $region61: #{tpu_custom_call.1} parent=1 // pred_fallthru
      _
    // Predicated region
    $region62: #{tpu_custom_call.1} parent=1 // pred_check
      _
    $region63: #{tpu_custom_call.1} parent=1 // pred_check_branch
      %54 = sbr.rel (0) target = $region65
    $region64: #{tpu_custom_call.1} parent=1 // pred_region
      _
    $region65: #{tpu_custom_call.1} parent=1 // pred_fallthru
      _
    // Predicated region
    $region66: #{tpu_custom_call.1} parent=1 // pred_check
      _
    $region67: #{tpu_custom_call.1} parent=1 // pred_check_branch
      %56 = sbr.rel (0) target = $region69
    $region68: #{tpu_custom_call.1} parent=1 // pred_region
      _
    $region69: #{tpu_custom_call.1} parent=1 // pred_fallthru
      _
    %p57 = scmp.eq.s32.totalorder 0, 0
    // Predicated region
    $region70: #{tpu_custom_call.1} parent=1 // pred_check
      %p58 = pneg %p57
    $region71: #{tpu_custom_call.1} parent=1 // pred_check_branch
      %60 = sbr.rel (%p58) target = $region73
    $region72: #{tpu_custom_call.1} parent=1 // pred_region
      %vm61 = vcmask 254976
      %62 = vst.msk [vmem:[#allocation2] sm:$0x3] %vm61, 0.0
    $region73: #{tpu_custom_call.1} parent=1 // pred_fallthru
      _
    %v63 = vld [vmem:[%s0] sm:$0xff]
    %v64 = vld [vmem:[%s0 + $0x8] sm:$0xff]
    %v65 = vld [vmem:[%s1] sm:$0xff]
    %v66 = vld [vmem:[%s1 + $0x8] sm:$0xff]
    %v67 = vld [vmem:[%s2] sm:$0xff]
    %v68 = vld [vmem:[%s2 + $0x8] sm:$0xff]
    %v69 = vld [vmem:[%s3] sm:$0xff]
    %v70 = vld [vmem:[%s3 + $0x8] sm:$0xff]
    %v71 = vld [vmem:[%s4] sm:$0x1]
    %v72 = vld [vmem:[%s5] sm:$0xf]
    %v73 = vld [vmem:[%s6] sm:$0x1]
    %v74 = vld [vmem:[%s7] sm:$0x1]
    %v75 = vld [vmem:[%s8] sm:$0x1]
    %v76 = vld [vmem:[%s9] sm:$0xf]
    %v77 = vld [vmem:[%s10] sm:$0xf]
    %v78 = vld [vmem:[%s11] sm:$0xff]
    %v79 = vld [vmem:[%s11 + $0x8] sm:$0xff]
    %v80 = vld [vmem:[%s11 + $0x10] sm:$0xff]
    %v81 = vld [vmem:[%s11 + $0x18] sm:$0xff]
    %v82 = vld [vmem:[%s12] sm:$0x1]
    %v83 = vld [vmem:[%s13] sm:$0xff]
    %v84 = vld [vmem:[%s13 + $0x8] sm:$0xff]
    %v85 = vld [vmem:[%s13 + $0x10] sm:$0xff]
    %v86 = vld [vmem:[%s13 + $0x18] sm:$0xff]
    %v87 = vld [vmem:[%s14] sm:$0x1]
    %v88 = vld [vmem:[#allocation2] sm:$0x3]
    %v90 = vperm.slane %v73, 0
    %v94 = vrot.slane %v68, 7
    %vm95 = vcmask 1041409
    %v96 = vsel %vm95, %v94, %v67
    %vm97 = vcmask 31744
    %v98 = vsel %vm97, %v96, 0
    %vm100 = vcmask 1043456
    %v102 = vsel %vm100, %v72, 0
    %104 = vmatpush.msra.mxu0 0.0
    %105 = vmatpush.msra.mxu0 0.0
    %106 = vmatpush.msra.mxu0 0.0
    %107 = vmatpush.msra.mxu0 0.0
    %108 = vmatpush.msra.mxu0 0.0
    %109 = vmatpush.msra.mxu0 0.0
    %110 = vmatpush.msra.mxu0 0.0
    %111 = vmatpush.msra.mxu0 0.0
    %112 = vmatpush.msra.mxu0 0.0
    %113 = vmatpush.msra.mxu0 0.0
    %114 = vmatpush.msra.mxu0 0.0
    %115 = vmatpush.msra.mxu0 0.0
    %116 = vmatpush.msra.mxu0 0.0
    %117 = vmatpush.msra.mxu0 0.0
    %118 = vmatpush.msra.mxu0 0.0
    %119 = vmatpush.msra.mxu0 %v102
    %120 = vmatmul.f32.gmra.mxu0 %v98
    %v121 = vpop.f32.mrf.mxu0
    %v122 = vadd.f32 %v90, %v121
    %123 = vdwg.mxu0
    %v124 = vmax.f32 %v122, 0.0
    %v125 = vsub.f32 0.0, %v124
    %v126 = vmul.f32 %v125, 1.442695
    %v127 = vpow.pop %v126
    %v129 = vperm.slane %v74, 0
    %v131 = vmul.f32 %v67, %v129
    %v132 = vmul.f32 %v68, %v129
    %v134 = vperm.slane %v75, 0
    %v136 = vadd.f32 %v131, %v134
    %v137 = vadd.f32 %v132, %v134
    %v138 = vmax.f32 %v136, 0.0
    %v139 = vmax.f32 %v137, 0.0
    %v140 = vsub.f32 0.0, %v138
    %v141 = vsub.f32 0.0, %v139
    %v142 = vmul.f32 %v140, 1.442695
    %v143 = vpow.pop %v142
    %v144 = vmul.f32 %v141, 1.442695
    %v145 = vpow.pop %v144
    %v146 = vmul.f32 %v88, %v127
    %v147 = vmul.f32 %v143, %v69
    %v148 = vmul.f32 %v145, %v70
    %v149 = vsub.f32 1.0, %v143
    %v150 = vsub.f32 1.0, %v145
    %v152 = vperm.slane %v71, 0
    %v154 = vmul.f32 %v149, %v152
    %v155 = vmul.f32 %v150, %v152
    %v156 = vadd.f32 %v147, %v154
    %v157 = vadd.f32 %v148, %v155
    %v158 = vmul.f32 %v65, %v63
    %v159 = vmul.f32 %v66, %v64
    %v160 = vsub.f32 1.0, %v65
    %v161 = vsub.f32 1.0, %v66
    %v162 = vmul.f32 %v160, %v156
    %v163 = vmul.f32 %v161, %v157
    %v164 = vadd.f32 %v158, %v162
    %v165 = vadd.f32 %v159, %v163
    %v168 = vrot.slane %v66, 7
    %v169 = vsel %vm95, %v168, %v65
    %v170 = vsel %vm97, %v169, 0
    %v173 = vsel %vm100, %v77, 0
    %175 = vmatpush.msra.mxu0 0.0
    %176 = vmatpush.msra.mxu0 0.0
    %177 = vmatpush.msra.mxu0 0.0
    %178 = vmatpush.msra.mxu0 0.0
    %179 = vmatpush.msra.mxu0 0.0
    %180 = vmatpush.msra.mxu0 0.0
    %181 = vmatpush.msra.mxu0 0.0
    %182 = vmatpush.msra.mxu0 0.0
    %183 = vmatpush.msra.mxu0 0.0
    %184 = vmatpush.msra.mxu0 0.0
    %185 = vmatpush.msra.mxu0 0.0
    %186 = vmatpush.msra.mxu0 0.0
    %187 = vmatpush.msra.mxu0 0.0
    %188 = vmatpush.msra.mxu0 0.0
    %189 = vmatpush.msra.mxu0 0.0
    %190 = vmatpush.msra.mxu0 %v173
    %191 = vmatmul.f32.gmra.mxu0 %v170
    %v192 = vpop.f32.mrf.mxu0
    %v193 = vadd.f32 0.0, %v192
    %194 = vdwg.mxu0
    %v197 = vrot.slane %v165, 7
    %v198 = vsel %vm95, %v197, %v164
    %v199 = vsel %vm97, %v198, 0
    %v202 = vsel %vm100, %v76, 0
    %204 = vmatpush.msra.mxu0 0.0
    %205 = vmatpush.msra.mxu0 0.0
    %206 = vmatpush.msra.mxu0 0.0
    %207 = vmatpush.msra.mxu0 0.0
    %208 = vmatpush.msra.mxu0 0.0
    %209 = vmatpush.msra.mxu0 0.0
    %210 = vmatpush.msra.mxu0 0.0
    %211 = vmatpush.msra.mxu0 0.0
    %212 = vmatpush.msra.mxu0 0.0
    %213 = vmatpush.msra.mxu0 0.0
    %214 = vmatpush.msra.mxu0 0.0
    %215 = vmatpush.msra.mxu0 0.0
    %216 = vmatpush.msra.mxu0 0.0
    %217 = vmatpush.msra.mxu0 0.0
    %218 = vmatpush.msra.mxu0 0.0
    %219 = vmatpush.msra.mxu0 %v202
    %220 = vmatmul.f32.gmra.mxu0 %v199
    %v221 = vpop.f32.mrf.mxu0
    %v222 = vadd.f32 %v193, %v221
    %223 = vdwg.mxu0
    %vm224 = vcmask 261120
    %v226 = vsel %vm224, %v146, 0
    %228 = vmatpush.msra.mxu0 0.0
    %229 = vmatpush.msra.mxu0 0.0
    %230 = vmatpush.msra.mxu0 0.0
    %231 = vmatpush.msra.mxu0 0.0
    %232 = vmatpush.msra.mxu0 0.0
    %233 = vmatpush.msra.mxu0 0.0
    %234 = vmatpush.msra.mxu0 0.0
    %235 = vmatpush.msra.mxu0 0.0
    %236 = vmatpush.msra.mxu0 0.0
    %237 = vmatpush.msra.mxu0 0.0
    %238 = vmatpush.msra.mxu0 0.0
    %239 = vmatpush.msra.mxu0 0.0
    %240 = vmatpush.msra.mxu0 %v81
    %241 = vmatpush.msra.mxu0 %v80
    %242 = vmatpush.msra.mxu0 %v79
    %243 = vmatpush.msra.mxu0 %v78
    %244 = vmatmul.f32.gmra.mxu0 %v226
    %v245 = vpop.f32.mrf.mxu0
    %v246 = vadd.f32 0.0, %v245
    %247 = vdwg.mxu0
    %v248 = vadd.f32 %v222, %v246
    %v250 = vperm.slane %v82, 0
    %v252 = vadd.f32 %v248, %v250
    %v254 = vperm.slane %v87, 0
    %256 = vmatpush.msra.mxu0 0.0
    %257 = vmatpush.msra.mxu0 0.0
    %258 = vmatpush.msra.mxu0 0.0
    %259 = vmatpush.msra.mxu0 0.0
    %260 = vmatpush.msra.mxu0 0.0
    %261 = vmatpush.msra.mxu0 0.0
    %262 = vmatpush.msra.mxu0 0.0
    %263 = vmatpush.msra.mxu0 0.0
    %264 = vmatpush.msra.mxu0 0.0
    %265 = vmatpush.msra.mxu0 0.0
    %266 = vmatpush.msra.mxu0 0.0
    %267 = vmatpush.msra.mxu0 0.0
    %268 = vmatpush.msra.mxu0 %v86
    %269 = vmatpush.msra.mxu0 %v85
    %270 = vmatpush.msra.mxu0 %v84
    %271 = vmatpush.msra.mxu0 %v83
    %272 = vmatmul.f32.gmra.mxu0 %v226
    %v273 = vpop.f32.mrf.mxu0
    %v274 = vadd.f32 %v254, %v273
    %275 = vdwg.mxu0
    %v276 = vxor.u32 %v252, 2147483648
    %v277 = vmul.f32 %v276, 1.442695
    %v278 = vpow.pop %v277
    %v279 = vadd.f32 %v278, 1.0
    %v280 = vrcp.pop %v279
    %v281 = vmul.f32 %v279, %v280
    %v282 = vsub.f32 1.0, %v281
    %v283 = vmul.f32 %v280, %v282
    %v284 = vadd.f32 %v280, %v283
    %vm285 = vweird.f32 %v279
    %vm286 = vweird.f32 %v280
    %vm287 = vmor %vm285, %vm286
    %v288 = vsel %vm287, %v280, %v284
    %v289 = vand.u32 2147483647, %v279
    %vm290 = vcmp.eq.f32.partialorder %v289, 8.507059e+37
    %v291 = vand.u32 %v279, 2147483648
    %v292 = vor.u32 1.1754944e-38, %v291
    %v293 = vsel %vm290, %v292, %v288
    %v294 = vmul.f32 1.0, %v293
    %v295 = vmul.f32 %v294, %v274
    %297 = vrot.lane.b32.xlu0 %v295, 64
    %v298 = vpop.permute.xlu0 %297
    %v300 = vadd.f32 %v252, %v298
    %v301 = vtanh.pop %v300
    %v302 = vsub.f32 1.0, %v294
    %304 = vrot.lane.b32.xlu0 %v301, 96
    %v305 = vpop.permute.xlu0 %304
    %v307 = vmul.f32 %v302, %v305
    %308 = vrot.lane.b32.xlu0 %v146, 32
    %v309 = vpop.permute.xlu0 %308
    %v311 = vmul.f32 %v294, %v309
    %v312 = vadd.f32 %v307, %v311
    %v313 = vrot.slane %v67, 1
    %v314 = vsel %vm95, %v68, %v313
    %v315 = vsel %vm97, %v314, 0
    %317 = vmatpush.msra.mxu0 0.0
    %318 = vmatpush.msra.mxu0 0.0
    %319 = vmatpush.msra.mxu0 0.0
    %320 = vmatpush.msra.mxu0 0.0
    %321 = vmatpush.msra.mxu0 0.0
    %322 = vmatpush.msra.mxu0 0.0
    %323 = vmatpush.msra.mxu0 0.0
    %324 = vmatpush.msra.mxu0 0.0
    %325 = vmatpush.msra.mxu0 0.0
    %326 = vmatpush.msra.mxu0 0.0
    %327 = vmatpush.msra.mxu0 0.0
    %328 = vmatpush.msra.mxu0 0.0
    %329 = vmatpush.msra.mxu0 0.0
    %330 = vmatpush.msra.mxu0 0.0
    %331 = vmatpush.msra.mxu0 0.0
    %332 = vmatpush.msra.mxu0 %v102
    %333 = vmatmul.f32.gmra.mxu0 %v315
    %v334 = vpop.f32.mrf.mxu0
    %v335 = vadd.f32 %v90, %v334
    %336 = vdwg.mxu0
    %v337 = vmax.f32 %v335, 0.0
    %v338 = vsub.f32 0.0, %v337
    %v339 = vmul.f32 %v338, 1.442695
    %v340 = vpow.pop %v339
    %342 = vrot.lane.b32.xlu0 %v340, 32
    %v343 = vpop.permute.xlu0 %342
    %v345 = vmul.f32 %v312, %v343
    %v346 = vrot.slane %v65, 1
    %v347 = vsel %vm95, %v66, %v346
    %v348 = vsel %vm97, %v347, 0
    %350 = vmatpush.msra.mxu0 0.0
    %351 = vmatpush.msra.mxu0 0.0
    %352 = vmatpush.msra.mxu0 0.0
    %353 = vmatpush.msra.mxu0 0.0
    %354 = vmatpush.msra.mxu0 0.0
    %355 = vmatpush.msra.mxu0 0.0
    %356 = vmatpush.msra.mxu0 0.0
    %357 = vmatpush.msra.mxu0 0.0
    %358 = vmatpush.msra.mxu0 0.0
    %359 = vmatpush.msra.mxu0 0.0
    %360 = vmatpush.msra.mxu0 0.0
    %361 = vmatpush.msra.mxu0 0.0
    %362 = vmatpush.msra.mxu0 0.0
    %363 = vmatpush.msra.mxu0 0.0
    %364 = vmatpush.msra.mxu0 0.0
    %365 = vmatpush.msra.mxu0 %v173
    %366 = vmatmul.f32.gmra.mxu0 %v348
    %v367 = vpop.f32.mrf.mxu0
    %v368 = vadd.f32 0.0, %v367
    %369 = vdwg.mxu0
    %v370 = vrot.slane %v164, 1
    %v371 = vsel %vm95, %v165, %v370
    %v372 = vsel %vm97, %v371, 0
    %374 = vmatpush.msra.mxu0 0.0
    %375 = vmatpush.msra.mxu0 0.0
    %376 = vmatpush.msra.mxu0 0.0
    %377 = vmatpush.msra.mxu0 0.0
    %378 = vmatpush.msra.mxu0 0.0
    %379 = vmatpush.msra.mxu0 0.0
    %380 = vmatpush.msra.mxu0 0.0
    %381 = vmatpush.msra.mxu0 0.0
    %382 = vmatpush.msra.mxu0 0.0
    %383 = vmatpush.msra.mxu0 0.0
    %384 = vmatpush.msra.mxu0 0.0
    %385 = vmatpush.msra.mxu0 0.0
    %386 = vmatpush.msra.mxu0 0.0
    %387 = vmatpush.msra.mxu0 0.0
    %388 = vmatpush.msra.mxu0 0.0
    %389 = vmatpush.msra.mxu0 %v202
    %390 = vmatmul.f32.gmra.mxu0 %v372
    %v391 = vpop.f32.mrf.mxu0
    %v392 = vadd.f32 %v368, %v391
    %393 = vdwg.mxu0
    %395 = vrot.lane.b32.xlu0 %v345, 96
    %v396 = vpop.permute.xlu0 %395
    %v397 = vsel %vm224, %v396, 0
    %399 = vmatpush.msra.mxu0 0.0
    %400 = vmatpush.msra.mxu0 0.0
    %401 = vmatpush.msra.mxu0 0.0
    %402 = vmatpush.msra.mxu0 0.0
    %403 = vmatpush.msra.mxu0 0.0
    %404 = vmatpush.msra.mxu0 0.0
    %405 = vmatpush.msra.mxu0 0.0
    %406 = vmatpush.msra.mxu0 0.0
    %407 = vmatpush.msra.mxu0 0.0
    %408 = vmatpush.msra.mxu0 0.0
    %409 = vmatpush.msra.mxu0 0.0
    %410 = vmatpush.msra.mxu0 0.0
    %411 = vmatpush.msra.mxu0 %v81
    %412 = vmatpush.msra.mxu0 %v80
    %413 = vmatpush.msra.mxu0 %v79
    %414 = vmatpush.msra.mxu0 %v78
    %415 = vmatmul.f32.gmra.mxu0 %v397
    %v416 = vpop.f32.mrf.mxu0
    %v417 = vadd.f32 0.0, %v416
    %418 = vdwg.mxu0
    %v419 = vadd.f32 %v392, %v417
    %v420 = vadd.f32 %v419, %v250
    %421 = vmatpush.msra.mxu0 0.0
    %422 = vmatpush.msra.mxu0 0.0
    %423 = vmatpush.msra.mxu0 0.0
    %424 = vmatpush.msra.mxu0 0.0
    %425 = vmatpush.msra.mxu0 0.0
    %426 = vmatpush.msra.mxu0 0.0
    %427 = vmatpush.msra.mxu0 0.0
    %428 = vmatpush.msra.mxu0 0.0
    %429 = vmatpush.msra.mxu0 0.0
    %430 = vmatpush.msra.mxu0 0.0
    %431 = vmatpush.msra.mxu0 0.0
    %432 = vmatpush.msra.mxu0 0.0
    %433 = vmatpush.msra.mxu0 %v86
    %434 = vmatpush.msra.mxu0 %v85
    %435 = vmatpush.msra.mxu0 %v84
    %436 = vmatpush.msra.mxu0 %v83
    %437 = vmatmul.f32.gmra.mxu0 %v397
    %v438 = vpop.f32.mrf.mxu0
    %v439 = vadd.f32 %v254, %v438
    %440 = vdwg.mxu0
    %v441 = vxor.u32 %v420, 2147483648
    %v442 = vmul.f32 %v441, 1.442695
    %v443 = vpow.pop %v442
    %v444 = vadd.f32 %v443, 1.0
    %v445 = vrcp.pop %v444
    %v446 = vmul.f32 %v444, %v445
    %v447 = vsub.f32 1.0, %v446
    %v448 = vmul.f32 %v445, %v447
    %v449 = vadd.f32 %v445, %v448
    %vm450 = vweird.f32 %v444
    %vm451 = vweird.f32 %v445
    %vm452 = vmor %vm450, %vm451
    %v453 = vsel %vm452, %v445, %v449
    %v454 = vand.u32 2147483647, %v444
    %vm455 = vcmp.eq.f32.partialorder %v454, 8.507059e+37
    %v456 = vand.u32 %v444, 2147483648
    %v457 = vor.u32 1.1754944e-38, %v456
    %v458 = vsel %vm455, %v457, %v453
    %v459 = vmul.f32 1.0, %v458
    %v460 = vmul.f32 %v459, %v439
    %462 = vrot.lane.b32.xlu0 %v460, 64
    %v463 = vpop.permute.xlu0 %462
    %v465 = vadd.f32 %v420, %v463
    %v466 = vtanh.pop %v465
    %v467 = vsub.f32 1.0, %v459
    %469 = vrot.lane.b32.xlu0 %v466, 96
    %v470 = vpop.permute.xlu0 %469
    %v472 = vmul.f32 %v467, %v470
    %v473 = vmul.f32 %v459, %v345
    %v474 = vadd.f32 %v472, %v473
    %v475 = vrot.slane %v67, 2
    %v476 = vrot.slane %v68, 1
    %v477 = vsel %vm95, %v476, %v475
    %v478 = vsel %vm97, %v477, 0
    %480 = vmatpush.msra.mxu0 0.0
    %481 = vmatpush.msra.mxu0 0.0
    %482 = vmatpush.msra.mxu0 0.0
    %483 = vmatpush.msra.mxu0 0.0
    %484 = vmatpush.msra.mxu0 0.0
    %485 = vmatpush.msra.mxu0 0.0
    %486 = vmatpush.msra.mxu0 0.0
    %487 = vmatpush.msra.mxu0 0.0
    %488 = vmatpush.msra.mxu0 0.0
    %489 = vmatpush.msra.mxu0 0.0
    %490 = vmatpush.msra.mxu0 0.0
    %491 = vmatpush.msra.mxu0 0.0
    %492 = vmatpush.msra.mxu0 0.0
    %493 = vmatpush.msra.mxu0 0.0
    %494 = vmatpush.msra.mxu0 0.0
    %495 = vmatpush.msra.mxu0 %v102
    %496 = vmatmul.f32.gmra.mxu0 %v478
    %v497 = vpop.f32.mrf.mxu0
    %v498 = vadd.f32 %v90, %v497
    %499 = vdwg.mxu0
    %v500 = vmax.f32 %v498, 0.0
    %v501 = vsub.f32 0.0, %v500
    %v502 = vmul.f32 %v501, 1.442695
    %v503 = vpow.pop %v502
    %505 = vrot.lane.b32.xlu0 %v503, 32
    %v506 = vpop.permute.xlu0 %505
    %v508 = vmul.f32 %v474, %v506
    %v509 = vrot.slane %v65, 2
    %v510 = vrot.slane %v66, 1
    %v511 = vsel %vm95, %v510, %v509
    %v512 = vsel %vm97, %v511, 0
    %514 = vmatpush.msra.mxu0 0.0
    %515 = vmatpush.msra.mxu0 0.0
    %516 = vmatpush.msra.mxu0 0.0
    %517 = vmatpush.msra.mxu0 0.0
    %518 = vmatpush.msra.mxu0 0.0
    %519 = vmatpush.msra.mxu0 0.0
    %520 = vmatpush.msra.mxu0 0.0
    %521 = vmatpush.msra.mxu0 0.0
    %522 = vmatpush.msra.mxu0 0.0
    %523 = vmatpush.msra.mxu0 0.0
    %524 = vmatpush.msra.mxu0 0.0
    %525 = vmatpush.msra.mxu0 0.0
    %526 = vmatpush.msra.mxu0 0.0
    %527 = vmatpush.msra.mxu0 0.0
    %528 = vmatpush.msra.mxu0 0.0
    %529 = vmatpush.msra.mxu0 %v173
    %530 = vmatmul.f32.gmra.mxu0 %v512
    %v531 = vpop.f32.mrf.mxu0
    %v532 = vadd.f32 0.0, %v531
    %533 = vdwg.mxu0
    %v534 = vrot.slane %v164, 2
    %v535 = vrot.slane %v165, 1
    %v536 = vsel %vm95, %v535, %v534
    %v537 = vsel %vm97, %v536, 0
    %539 = vmatpush.msra.mxu0 0.0
    %540 = vmatpush.msra.mxu0 0.0
    %541 = vmatpush.msra.mxu0 0.0
    %542 = vmatpush.msra.mxu0 0.0
    %543 = vmatpush.msra.mxu0 0.0
    %544 = vmatpush.msra.mxu0 0.0
    %545 = vmatpush.msra.mxu0 0.0
    %546 = vmatpush.msra.mxu0 0.0
    %547 = vmatpush.msra.mxu0 0.0
    %548 = vmatpush.msra.mxu0 0.0
    %549 = vmatpush.msra.mxu0 0.0
    %550 = vmatpush.msra.mxu0 0.0
    %551 = vmatpush.msra.mxu0 0.0
    %552 = vmatpush.msra.mxu0 0.0
    %553 = vmatpush.msra.mxu0 0.0
    %554 = vmatpush.msra.mxu0 %v202
    %555 = vmatmul.f32.gmra.mxu0 %v537
    %v556 = vpop.f32.mrf.mxu0
    %v557 = vadd.f32 %v532, %v556
    %558 = vdwg.mxu0
    %560 = vrot.lane.b32.xlu0 %v508, 96
    %v561 = vpop.permute.xlu0 %560
    %v562 = vsel %vm224, %v561, 0
    %564 = vmatpush.msra.mxu0 0.0
    %565 = vmatpush.msra.mxu0 0.0
    %566 = vmatpush.msra.mxu0 0.0
    %567 = vmatpush.msra.mxu0 0.0
    %568 = vmatpush.msra.mxu0 0.0
    %569 = vmatpush.msra.mxu0 0.0
    %570 = vmatpush.msra.mxu0 0.0
    %571 = vmatpush.msra.mxu0 0.0
    %572 = vmatpush.msra.mxu0 0.0
    %573 = vmatpush.msra.mxu0 0.0
    %574 = vmatpush.msra.mxu0 0.0
    %575 = vmatpush.msra.mxu0 0.0
    %576 = vmatpush.msra.mxu0 %v81
    %577 = vmatpush.msra.mxu0 %v80
    %578 = vmatpush.msra.mxu0 %v79
    %579 = vmatpush.msra.mxu0 %v78
    %580 = vmatmul.f32.gmra.mxu0 %v562
    %v581 = vpop.f32.mrf.mxu0
    %v582 = vadd.f32 0.0, %v581
    %583 = vdwg.mxu0
    %v584 = vadd.f32 %v557, %v582
    %v585 = vadd.f32 %v584, %v250
    %586 = vmatpush.msra.mxu0 0.0
    %587 = vmatpush.msra.mxu0 0.0
    %588 = vmatpush.msra.mxu0 0.0
    %589 = vmatpush.msra.mxu0 0.0
    %590 = vmatpush.msra.mxu0 0.0
    %591 = vmatpush.msra.mxu0 0.0
    %592 = vmatpush.msra.mxu0 0.0
    %593 = vmatpush.msra.mxu0 0.0
    %594 = vmatpush.msra.mxu0 0.0
    %595 = vmatpush.msra.mxu0 0.0
    %596 = vmatpush.msra.mxu0 0.0
    %597 = vmatpush.msra.mxu0 0.0
    %598 = vmatpush.msra.mxu0 %v86
    %599 = vmatpush.msra.mxu0 %v85
    %600 = vmatpush.msra.mxu0 %v84
    %601 = vmatpush.msra.mxu0 %v83
    %602 = vmatmul.f32.gmra.mxu0 %v562
    %v603 = vpop.f32.mrf.mxu0
    %v604 = vadd.f32 %v254, %v603
    %605 = vdwg.mxu0
    %v606 = vxor.u32 %v585, 2147483648
    %v607 = vmul.f32 %v606, 1.442695
    %v608 = vpow.pop %v607
    %v609 = vadd.f32 %v608, 1.0
    %v610 = vrcp.pop %v609
    %v611 = vmul.f32 %v609, %v610
    %v612 = vsub.f32 1.0, %v611
    %v613 = vmul.f32 %v610, %v612
    %v614 = vadd.f32 %v610, %v613
    %vm615 = vweird.f32 %v609
    %vm616 = vweird.f32 %v610
    %vm617 = vmor %vm615, %vm616
    %v618 = vsel %vm617, %v610, %v614
    %v619 = vand.u32 2147483647, %v609
    %vm620 = vcmp.eq.f32.partialorder %v619, 8.507059e+37
    %v621 = vand.u32 %v609, 2147483648
    %v622 = vor.u32 1.1754944e-38, %v621
    %v623 = vsel %vm620, %v622, %v618
    %v624 = vmul.f32 1.0, %v623
    %v625 = vmul.f32 %v624, %v604
    %627 = vrot.lane.b32.xlu0 %v625, 64
    %v628 = vpop.permute.xlu0 %627
    %v630 = vadd.f32 %v585, %v628
    %v631 = vtanh.pop %v630
    %v632 = vsub.f32 1.0, %v624
    %634 = vrot.lane.b32.xlu0 %v631, 96
    %v635 = vpop.permute.xlu0 %634
    %v637 = vmul.f32 %v632, %v635
    %v638 = vmul.f32 %v624, %v508
    %v639 = vadd.f32 %v637, %v638
    %v640 = vrot.slane %v67, 3
    %v641 = vrot.slane %v68, 2
    %v642 = vsel %vm95, %v641, %v640
    %v643 = vsel %vm97, %v642, 0
    %645 = vmatpush.msra.mxu0 0.0
    %646 = vmatpush.msra.mxu0 0.0
    %647 = vmatpush.msra.mxu0 0.0
    %648 = vmatpush.msra.mxu0 0.0
    %649 = vmatpush.msra.mxu0 0.0
    %650 = vmatpush.msra.mxu0 0.0
    %651 = vmatpush.msra.mxu0 0.0
    %652 = vmatpush.msra.mxu0 0.0
    %653 = vmatpush.msra.mxu0 0.0
    %654 = vmatpush.msra.mxu0 0.0
    %655 = vmatpush.msra.mxu0 0.0
    %656 = vmatpush.msra.mxu0 0.0
    %657 = vmatpush.msra.mxu0 0.0
    %658 = vmatpush.msra.mxu0 0.0
    %659 = vmatpush.msra.mxu0 0.0
    %660 = vmatpush.msra.mxu0 %v102
    %661 = vmatmul.f32.gmra.mxu0 %v643
    %v662 = vpop.f32.mrf.mxu0
    %v663 = vadd.f32 %v90, %v662
    %664 = vdwg.mxu0
    %v665 = vmax.f32 %v663, 0.0
    %v666 = vsub.f32 0.0, %v665
    %v667 = vmul.f32 %v666, 1.442695
    %v668 = vpow.pop %v667
    %670 = vrot.lane.b32.xlu0 %v668, 32
    %v671 = vpop.permute.xlu0 %670
    %v673 = vmul.f32 %v639, %v671
    %v674 = vrot.slane %v65, 3
    %v675 = vrot.slane %v66, 2
    %v676 = vsel %vm95, %v675, %v674
    %v677 = vsel %vm97, %v676, 0
    %679 = vmatpush.msra.mxu0 0.0
    %680 = vmatpush.msra.mxu0 0.0
    %681 = vmatpush.msra.mxu0 0.0
    %682 = vmatpush.msra.mxu0 0.0
    %683 = vmatpush.msra.mxu0 0.0
    %684 = vmatpush.msra.mxu0 0.0
    %685 = vmatpush.msra.mxu0 0.0
    %686 = vmatpush.msra.mxu0 0.0
    %687 = vmatpush.msra.mxu0 0.0
    %688 = vmatpush.msra.mxu0 0.0
    %689 = vmatpush.msra.mxu0 0.0
    %690 = vmatpush.msra.mxu0 0.0
    %691 = vmatpush.msra.mxu0 0.0
    %692 = vmatpush.msra.mxu0 0.0
    %693 = vmatpush.msra.mxu0 0.0
    %694 = vmatpush.msra.mxu0 %v173
    %695 = vmatmul.f32.gmra.mxu0 %v677
    %v696 = vpop.f32.mrf.mxu0
    %v697 = vadd.f32 0.0, %v696
    %698 = vdwg.mxu0
    %v699 = vrot.slane %v164, 3
    %v700 = vrot.slane %v165, 2
    %v701 = vsel %vm95, %v700, %v699
    %v702 = vsel %vm97, %v701, 0
    %704 = vmatpush.msra.mxu0 0.0
    %705 = vmatpush.msra.mxu0 0.0
    %706 = vmatpush.msra.mxu0 0.0
    %707 = vmatpush.msra.mxu0 0.0
    %708 = vmatpush.msra.mxu0 0.0
    %709 = vmatpush.msra.mxu0 0.0
    %710 = vmatpush.msra.mxu0 0.0
    %711 = vmatpush.msra.mxu0 0.0
    %712 = vmatpush.msra.mxu0 0.0
    %713 = vmatpush.msra.mxu0 0.0
    %714 = vmatpush.msra.mxu0 0.0
    %715 = vmatpush.msra.mxu0 0.0
    %716 = vmatpush.msra.mxu0 0.0
    %717 = vmatpush.msra.mxu0 0.0
    %718 = vmatpush.msra.mxu0 0.0
    %719 = vmatpush.msra.mxu0 %v202
    %720 = vmatmul.f32.gmra.mxu0 %v702
    %v721 = vpop.f32.mrf.mxu0
    %v722 = vadd.f32 %v697, %v721
    %723 = vdwg.mxu0
    %725 = vrot.lane.b32.xlu0 %v673, 96
    %v726 = vpop.permute.xlu0 %725
    %v727 = vsel %vm224, %v726, 0
    %729 = vmatpush.msra.mxu0 0.0
    %730 = vmatpush.msra.mxu0 0.0
    %731 = vmatpush.msra.mxu0 0.0
    %732 = vmatpush.msra.mxu0 0.0
    %733 = vmatpush.msra.mxu0 0.0
    %734 = vmatpush.msra.mxu0 0.0
    %735 = vmatpush.msra.mxu0 0.0
    %736 = vmatpush.msra.mxu0 0.0
    %737 = vmatpush.msra.mxu0 0.0
    %738 = vmatpush.msra.mxu0 0.0
    %739 = vmatpush.msra.mxu0 0.0
    %740 = vmatpush.msra.mxu0 0.0
    %741 = vmatpush.msra.mxu0 %v81
    %742 = vmatpush.msra.mxu0 %v80
    %743 = vmatpush.msra.mxu0 %v79
    %744 = vmatpush.msra.mxu0 %v78
    %745 = vmatmul.f32.gmra.mxu0 %v727
    %v746 = vpop.f32.mrf.mxu0
    %v747 = vadd.f32 0.0, %v746
    %748 = vdwg.mxu0
    %v749 = vadd.f32 %v722, %v747
    %v750 = vadd.f32 %v749, %v250
    %751 = vmatpush.msra.mxu0 0.0
    %752 = vmatpush.msra.mxu0 0.0
    %753 = vmatpush.msra.mxu0 0.0
    %754 = vmatpush.msra.mxu0 0.0
    %755 = vmatpush.msra.mxu0 0.0
    %756 = vmatpush.msra.mxu0 0.0
    %757 = vmatpush.msra.mxu0 0.0
    %758 = vmatpush.msra.mxu0 0.0
    %759 = vmatpush.msra.mxu0 0.0
    %760 = vmatpush.msra.mxu0 0.0
    %761 = vmatpush.msra.mxu0 0.0
    %762 = vmatpush.msra.mxu0 0.0
    %763 = vmatpush.msra.mxu0 %v86
    %764 = vmatpush.msra.mxu0 %v85
    %765 = vmatpush.msra.mxu0 %v84
    %766 = vmatpush.msra.mxu0 %v83
    %767 = vmatmul.f32.gmra.mxu0 %v727
    %v768 = vpop.f32.mrf.mxu0
    %v769 = vadd.f32 %v254, %v768
    %770 = vdwg.mxu0
    %v771 = vxor.u32 %v750, 2147483648
    %v772 = vmul.f32 %v771, 1.442695
    %v773 = vpow.pop %v772
    %v774 = vadd.f32 %v773, 1.0
    %v775 = vrcp.pop %v774
    %v776 = vmul.f32 %v774, %v775
    %v777 = vsub.f32 1.0, %v776
    %v778 = vmul.f32 %v775, %v777
    %v779 = vadd.f32 %v775, %v778
    %vm780 = vweird.f32 %v774
    %vm781 = vweird.f32 %v775
    %vm782 = vmor %vm780, %vm781
    %v783 = vsel %vm782, %v775, %v779
    %v784 = vand.u32 2147483647, %v774
    %vm785 = vcmp.eq.f32.partialorder %v784, 8.507059e+37
    %v786 = vand.u32 %v774, 2147483648
    %v787 = vor.u32 1.1754944e-38, %v786
    %v788 = vsel %vm785, %v787, %v783
    %v789 = vmul.f32 1.0, %v788
    %v790 = vmul.f32 %v789, %v769
    %792 = vrot.lane.b32.xlu0 %v790, 64
    %v793 = vpop.permute.xlu0 %792
    %v795 = vadd.f32 %v750, %v793
    %v796 = vtanh.pop %v795
    %v797 = vsub.f32 1.0, %v789
    %799 = vrot.lane.b32.xlu0 %v796, 96
    %v800 = vpop.permute.xlu0 %799
    %v802 = vmul.f32 %v797, %v800
    %v803 = vmul.f32 %v789, %v673
    %v804 = vadd.f32 %v802, %v803
    %v805 = vrot.slane %v67, 4
    %v806 = vrot.slane %v68, 3
    %v807 = vsel %vm95, %v806, %v805
    %v808 = vsel %vm97, %v807, 0
    %810 = vmatpush.msra.mxu0 0.0
    %811 = vmatpush.msra.mxu0 0.0
    %812 = vmatpush.msra.mxu0 0.0
    %813 = vmatpush.msra.mxu0 0.0
    %814 = vmatpush.msra.mxu0 0.0
    %815 = vmatpush.msra.mxu0 0.0
    %816 = vmatpush.msra.mxu0 0.0
    %817 = vmatpush.msra.mxu0 0.0
    %818 = vmatpush.msra.mxu0 0.0
    %819 = vmatpush.msra.mxu0 0.0
    %820 = vmatpush.msra.mxu0 0.0
    %821 = vmatpush.msra.mxu0 0.0
    %822 = vmatpush.msra.mxu0 0.0
    %823 = vmatpush.msra.mxu0 0.0
    %824 = vmatpush.msra.mxu0 0.0
    %825 = vmatpush.msra.mxu0 %v102
    %826 = vmatmul.f32.gmra.mxu0 %v808
    %v827 = vpop.f32.mrf.mxu0
    %v828 = vadd.f32 %v90, %v827
    %829 = vdwg.mxu0
    %v830 = vmax.f32 %v828, 0.0
    %v831 = vsub.f32 0.0, %v830
    %v832 = vmul.f32 %v831, 1.442695
    %v833 = vpow.pop %v832
    %835 = vrot.lane.b32.xlu0 %v833, 32
    %v836 = vpop.permute.xlu0 %835
    %v838 = vmul.f32 %v804, %v836
    %v839 = vrot.slane %v65, 4
    %v840 = vrot.slane %v66, 3
    %v841 = vsel %vm95, %v840, %v839
    %v842 = vsel %vm97, %v841, 0
    %844 = vmatpush.msra.mxu0 0.0
    %845 = vmatpush.msra.mxu0 0.0
    %846 = vmatpush.msra.mxu0 0.0
    %847 = vmatpush.msra.mxu0 0.0
    %848 = vmatpush.msra.mxu0 0.0
    %849 = vmatpush.msra.mxu0 0.0
    %850 = vmatpush.msra.mxu0 0.0
    %851 = vmatpush.msra.mxu0 0.0
    %852 = vmatpush.msra.mxu0 0.0
    %853 = vmatpush.msra.mxu0 0.0
    %854 = vmatpush.msra.mxu0 0.0
    %855 = vmatpush.msra.mxu0 0.0
    %856 = vmatpush.msra.mxu0 0.0
    %857 = vmatpush.msra.mxu0 0.0
    %858 = vmatpush.msra.mxu0 0.0
    %859 = vmatpush.msra.mxu0 %v173
    %860 = vmatmul.f32.gmra.mxu0 %v842
    %v861 = vpop.f32.mrf.mxu0
    %v862 = vadd.f32 0.0, %v861
    %863 = vdwg.mxu0
    %v864 = vrot.slane %v164, 4
    %v865 = vrot.slane %v165, 3
    %v866 = vsel %vm95, %v865, %v864
    %v867 = vsel %vm97, %v866, 0
    %869 = vmatpush.msra.mxu0 0.0
    %870 = vmatpush.msra.mxu0 0.0
    %871 = vmatpush.msra.mxu0 0.0
    %872 = vmatpush.msra.mxu0 0.0
    %873 = vmatpush.msra.mxu0 0.0
    %874 = vmatpush.msra.mxu0 0.0
    %875 = vmatpush.msra.mxu0 0.0
    %876 = vmatpush.msra.mxu0 0.0
    %877 = vmatpush.msra.mxu0 0.0
    %878 = vmatpush.msra.mxu0 0.0
    %879 = vmatpush.msra.mxu0 0.0
    %880 = vmatpush.msra.mxu0 0.0
    %881 = vmatpush.msra.mxu0 0.0
    %882 = vmatpush.msra.mxu0 0.0
    %883 = vmatpush.msra.mxu0 0.0
    %884 = vmatpush.msra.mxu0 %v202
    %885 = vmatmul.f32.gmra.mxu0 %v867
    %v886 = vpop.f32.mrf.mxu0
    %v887 = vadd.f32 %v862, %v886
    %888 = vdwg.mxu0
    %890 = vrot.lane.b32.xlu0 %v838, 96
    %v891 = vpop.permute.xlu0 %890
    %v892 = vsel %vm224, %v891, 0
    %894 = vmatpush.msra.mxu0 0.0
    %895 = vmatpush.msra.mxu0 0.0
    %896 = vmatpush.msra.mxu0 0.0
    %897 = vmatpush.msra.mxu0 0.0
    %898 = vmatpush.msra.mxu0 0.0
    %899 = vmatpush.msra.mxu0 0.0
    %900 = vmatpush.msra.mxu0 0.0
    %901 = vmatpush.msra.mxu0 0.0
    %902 = vmatpush.msra.mxu0 0.0
    %903 = vmatpush.msra.mxu0 0.0
    %904 = vmatpush.msra.mxu0 0.0
    %905 = vmatpush.msra.mxu0 0.0
    %906 = vmatpush.msra.mxu0 %v81
    %907 = vmatpush.msra.mxu0 %v80
    %908 = vmatpush.msra.mxu0 %v79
    %909 = vmatpush.msra.mxu0 %v78
    %910 = vmatmul.f32.gmra.mxu0 %v892
    %v911 = vpop.f32.mrf.mxu0
    %v912 = vadd.f32 0.0, %v911
    %913 = vdwg.mxu0
    %v914 = vadd.f32 %v887, %v912
    %v915 = vadd.f32 %v914, %v250
    %916 = vmatpush.msra.mxu0 0.0
    %917 = vmatpush.msra.mxu0 0.0
    %918 = vmatpush.msra.mxu0 0.0
    %919 = vmatpush.msra.mxu0 0.0
    %920 = vmatpush.msra.mxu0 0.0
    %921 = vmatpush.msra.mxu0 0.0
    %922 = vmatpush.msra.mxu0 0.0
    %923 = vmatpush.msra.mxu0 0.0
    %924 = vmatpush.msra.mxu0 0.0
    %925 = vmatpush.msra.mxu0 0.0
    %926 = vmatpush.msra.mxu0 0.0
    %927 = vmatpush.msra.mxu0 0.0
    %928 = vmatpush.msra.mxu0 %v86
    %929 = vmatpush.msra.mxu0 %v85
    %930 = vmatpush.msra.mxu0 %v84
    %931 = vmatpush.msra.mxu0 %v83
    %932 = vmatmul.f32.gmra.mxu0 %v892
    %v933 = vpop.f32.mrf.mxu0
    %v934 = vadd.f32 %v254, %v933
    %935 = vdwg.mxu0
    %v936 = vxor.u32 %v915, 2147483648
    %v937 = vmul.f32 %v936, 1.442695
    %v938 = vpow.pop %v937
    %v939 = vadd.f32 %v938, 1.0
    %v940 = vrcp.pop %v939
    %v941 = vmul.f32 %v939, %v940
    %v942 = vsub.f32 1.0, %v941
    %v943 = vmul.f32 %v940, %v942
    %v944 = vadd.f32 %v940, %v943
    %vm945 = vweird.f32 %v939
    %vm946 = vweird.f32 %v940
    %vm947 = vmor %vm945, %vm946
    %v948 = vsel %vm947, %v940, %v944
    %v949 = vand.u32 2147483647, %v939
    %vm950 = vcmp.eq.f32.partialorder %v949, 8.507059e+37
    %v951 = vand.u32 %v939, 2147483648
    %v952 = vor.u32 1.1754944e-38, %v951
    %v953 = vsel %vm950, %v952, %v948
    %v954 = vmul.f32 1.0, %v953
    %v955 = vmul.f32 %v954, %v934
    %957 = vrot.lane.b32.xlu0 %v955, 64
    %v958 = vpop.permute.xlu0 %957
    %v960 = vadd.f32 %v915, %v958
    %v961 = vtanh.pop %v960
    %v962 = vsub.f32 1.0, %v954
    %964 = vrot.lane.b32.xlu0 %v961, 96
    %v965 = vpop.permute.xlu0 %964
    %v967 = vmul.f32 %v962, %v965
    %v968 = vmul.f32 %v954, %v838
    %v969 = vadd.f32 %v967, %v968
    %v970 = vrot.slane %v67, 5
    %v971 = vrot.slane %v68, 4
    %v972 = vsel %vm95, %v971, %v970
    %v973 = vsel %vm97, %v972, 0
    %975 = vmatpush.msra.mxu0 0.0
    %976 = vmatpush.msra.mxu0 0.0
    %977 = vmatpush.msra.mxu0 0.0
    %978 = vmatpush.msra.mxu0 0.0
    %979 = vmatpush.msra.mxu0 0.0
    %980 = vmatpush.msra.mxu0 0.0
    %981 = vmatpush.msra.mxu0 0.0
    %982 = vmatpush.msra.mxu0 0.0
    %983 = vmatpush.msra.mxu0 0.0
    %984 = vmatpush.msra.mxu0 0.0
    %985 = vmatpush.msra.mxu0 0.0
    %986 = vmatpush.msra.mxu0 0.0
    %987 = vmatpush.msra.mxu0 0.0
    %988 = vmatpush.msra.mxu0 0.0
    %989 = vmatpush.msra.mxu0 0.0
    %990 = vmatpush.msra.mxu0 %v102
    %991 = vmatmul.f32.gmra.mxu0 %v973
    %v992 = vpop.f32.mrf.mxu0
    %v993 = vadd.f32 %v90, %v992
    %994 = vdwg.mxu0
    %v995 = vmax.f32 %v993, 0.0
    %v996 = vsub.f32 0.0, %v995
    %v997 = vmul.f32 %v996, 1.442695
    %v998 = vpow.pop %v997
    %1000 = vrot.lane.b32.xlu0 %v998, 32
    %v1001 = vpop.permute.xlu0 %1000
    %v1003 = vmul.f32 %v969, %v1001
    %v1004 = vrot.slane %v65, 5
    %v1005 = vrot.slane %v66, 4
    %v1006 = vsel %vm95, %v1005, %v1004
    %v1007 = vsel %vm97, %v1006, 0
    %1009 = vmatpush.msra.mxu0 0.0
    %1010 = vmatpush.msra.mxu0 0.0
    %1011 = vmatpush.msra.mxu0 0.0
    %1012 = vmatpush.msra.mxu0 0.0
    %1013 = vmatpush.msra.mxu0 0.0
    %1014 = vmatpush.msra.mxu0 0.0
    %1015 = vmatpush.msra.mxu0 0.0
    %1016 = vmatpush.msra.mxu0 0.0
    %1017 = vmatpush.msra.mxu0 0.0
    %1018 = vmatpush.msra.mxu0 0.0
    %1019 = vmatpush.msra.mxu0 0.0
    %1020 = vmatpush.msra.mxu0 0.0
    %1021 = vmatpush.msra.mxu0 0.0
    %1022 = vmatpush.msra.mxu0 0.0
    %1023 = vmatpush.msra.mxu0 0.0
    %1024 = vmatpush.msra.mxu0 %v173
    %1025 = vmatmul.f32.gmra.mxu0 %v1007
    %v1026 = vpop.f32.mrf.mxu0
    %v1027 = vadd.f32 0.0, %v1026
    %1028 = vdwg.mxu0
    %v1029 = vrot.slane %v164, 5
    %v1030 = vrot.slane %v165, 4
    %v1031 = vsel %vm95, %v1030, %v1029
    %v1032 = vsel %vm97, %v1031, 0
    %1034 = vmatpush.msra.mxu0 0.0
    %1035 = vmatpush.msra.mxu0 0.0
    %1036 = vmatpush.msra.mxu0 0.0
    %1037 = vmatpush.msra.mxu0 0.0
    %1038 = vmatpush.msra.mxu0 0.0
    %1039 = vmatpush.msra.mxu0 0.0
    %1040 = vmatpush.msra.mxu0 0.0
    %1041 = vmatpush.msra.mxu0 0.0
    %1042 = vmatpush.msra.mxu0 0.0
    %1043 = vmatpush.msra.mxu0 0.0
    %1044 = vmatpush.msra.mxu0 0.0
    %1045 = vmatpush.msra.mxu0 0.0
    %1046 = vmatpush.msra.mxu0 0.0
    %1047 = vmatpush.msra.mxu0 0.0
    %1048 = vmatpush.msra.mxu0 0.0
    %1049 = vmatpush.msra.mxu0 %v202
    %1050 = vmatmul.f32.gmra.mxu0 %v1032
    %v1051 = vpop.f32.mrf.mxu0
    %v1052 = vadd.f32 %v1027, %v1051
    %1053 = vdwg.mxu0
    %1055 = vrot.lane.b32.xlu0 %v1003, 96
    %v1056 = vpop.permute.xlu0 %1055
    %v1057 = vsel %vm224, %v1056, 0
    %1059 = vmatpush.msra.mxu0 0.0
    %1060 = vmatpush.msra.mxu0 0.0
    %1061 = vmatpush.msra.mxu0 0.0
    %1062 = vmatpush.msra.mxu0 0.0
    %1063 = vmatpush.msra.mxu0 0.0
    %1064 = vmatpush.msra.mxu0 0.0
    %1065 = vmatpush.msra.mxu0 0.0
    %1066 = vmatpush.msra.mxu0 0.0
    %1067 = vmatpush.msra.mxu0 0.0
    %1068 = vmatpush.msra.mxu0 0.0
    %1069 = vmatpush.msra.mxu0 0.0
    %1070 = vmatpush.msra.mxu0 0.0
    %1071 = vmatpush.msra.mxu0 %v81
    %1072 = vmatpush.msra.mxu0 %v80
    %1073 = vmatpush.msra.mxu0 %v79
    %1074 = vmatpush.msra.mxu0 %v78
    %1075 = vmatmul.f32.gmra.mxu0 %v1057
    %v1076 = vpop.f32.mrf.mxu0
    %v1077 = vadd.f32 0.0, %v1076
    %1078 = vdwg.mxu0
    %v1079 = vadd.f32 %v1052, %v1077
    %v1080 = vadd.f32 %v1079, %v250
    %1081 = vmatpush.msra.mxu0 0.0
    %1082 = vmatpush.msra.mxu0 0.0
    %1083 = vmatpush.msra.mxu0 0.0
    %1084 = vmatpush.msra.mxu0 0.0
    %1085 = vmatpush.msra.mxu0 0.0
    %1086 = vmatpush.msra.mxu0 0.0
    %1087 = vmatpush.msra.mxu0 0.0
    %1088 = vmatpush.msra.mxu0 0.0
    %1089 = vmatpush.msra.mxu0 0.0
    %1090 = vmatpush.msra.mxu0 0.0
    %1091 = vmatpush.msra.mxu0 0.0
    %1092 = vmatpush.msra.mxu0 0.0
    %1093 = vmatpush.msra.mxu0 %v86
    %1094 = vmatpush.msra.mxu0 %v85
    %1095 = vmatpush.msra.mxu0 %v84
    %1096 = vmatpush.msra.mxu0 %v83
    %1097 = vmatmul.f32.gmra.mxu0 %v1057
    %v1098 = vpop.f32.mrf.mxu0
    %v1099 = vadd.f32 %v254, %v1098
    %1100 = vdwg.mxu0
    %v1101 = vxor.u32 %v1080, 2147483648
    %v1102 = vmul.f32 %v1101, 1.442695
    %v1103 = vpow.pop %v1102
    %v1104 = vadd.f32 %v1103, 1.0
    %v1105 = vrcp.pop %v1104
    %v1106 = vmul.f32 %v1104, %v1105
    %v1107 = vsub.f32 1.0, %v1106
    %v1108 = vmul.f32 %v1105, %v1107
    %v1109 = vadd.f32 %v1105, %v1108
    %vm1110 = vweird.f32 %v1104
    %vm1111 = vweird.f32 %v1105
    %vm1112 = vmor %vm1110, %vm1111
    %v1113 = vsel %vm1112, %v1105, %v1109
    %v1114 = vand.u32 2147483647, %v1104
    %vm1115 = vcmp.eq.f32.partialorder %v1114, 8.507059e+37
    %v1116 = vand.u32 %v1104, 2147483648
    %v1117 = vor.u32 1.1754944e-38, %v1116
    %v1118 = vsel %vm1115, %v1117, %v1113
    %v1119 = vmul.f32 1.0, %v1118
    %v1120 = vmul.f32 %v1119, %v1099
    %1122 = vrot.lane.b32.xlu0 %v1120, 64
    %v1123 = vpop.permute.xlu0 %1122
    %v1125 = vadd.f32 %v1080, %v1123
    %v1126 = vtanh.pop %v1125
    %v1127 = vsub.f32 1.0, %v1119
    %1129 = vrot.lane.b32.xlu0 %v1126, 96
    %v1130 = vpop.permute.xlu0 %1129
    %v1132 = vmul.f32 %v1127, %v1130
    %v1133 = vmul.f32 %v1119, %v1003
    %v1134 = vadd.f32 %v1132, %v1133
    %v1135 = vrot.slane %v67, 6
    %v1136 = vrot.slane %v68, 5
    %v1137 = vsel %vm95, %v1136, %v1135
    %v1138 = vsel %vm97, %v1137, 0
    %1140 = vmatpush.msra.mxu0 0.0
    %1141 = vmatpush.msra.mxu0 0.0
    %1142 = vmatpush.msra.mxu0 0.0
    %1143 = vmatpush.msra.mxu0 0.0
    %1144 = vmatpush.msra.mxu0 0.0
    %1145 = vmatpush.msra.mxu0 0.0
    %1146 = vmatpush.msra.mxu0 0.0
    %1147 = vmatpush.msra.mxu0 0.0
    %1148 = vmatpush.msra.mxu0 0.0
    %1149 = vmatpush.msra.mxu0 0.0
    %1150 = vmatpush.msra.mxu0 0.0
    %1151 = vmatpush.msra.mxu0 0.0
    %1152 = vmatpush.msra.mxu0 0.0
    %1153 = vmatpush.msra.mxu0 0.0
    %1154 = vmatpush.msra.mxu0 0.0
    %1155 = vmatpush.msra.mxu0 %v102
    %1156 = vmatmul.f32.gmra.mxu0 %v1138
    %v1157 = vpop.f32.mrf.mxu0
    %v1158 = vadd.f32 %v90, %v1157
    %1159 = vdwg.mxu0
    %v1160 = vmax.f32 %v1158, 0.0
    %v1161 = vsub.f32 0.0, %v1160
    %v1162 = vmul.f32 %v1161, 1.442695
    %v1163 = vpow.pop %v1162
    %1165 = vrot.lane.b32.xlu0 %v1163, 32
    %v1166 = vpop.permute.xlu0 %1165
    %v1168 = vmul.f32 %v1134, %v1166
    %v1169 = vrot.slane %v65, 6
    %v1170 = vrot.slane %v66, 5
    %v1171 = vsel %vm95, %v1170, %v1169
    %v1172 = vsel %vm97, %v1171, 0
    %1174 = vmatpush.msra.mxu0 0.0
    %1175 = vmatpush.msra.mxu0 0.0
    %1176 = vmatpush.msra.mxu0 0.0
    %1177 = vmatpush.msra.mxu0 0.0
    %1178 = vmatpush.msra.mxu0 0.0
    %1179 = vmatpush.msra.mxu0 0.0
    %1180 = vmatpush.msra.mxu0 0.0
    %1181 = vmatpush.msra.mxu0 0.0
    %1182 = vmatpush.msra.mxu0 0.0
    %1183 = vmatpush.msra.mxu0 0.0
    %1184 = vmatpush.msra.mxu0 0.0
    %1185 = vmatpush.msra.mxu0 0.0
    %1186 = vmatpush.msra.mxu0 0.0
    %1187 = vmatpush.msra.mxu0 0.0
    %1188 = vmatpush.msra.mxu0 0.0
    %1189 = vmatpush.msra.mxu0 %v173
    %1190 = vmatmul.f32.gmra.mxu0 %v1172
    %v1191 = vpop.f32.mrf.mxu0
    %v1192 = vadd.f32 0.0, %v1191
    %1193 = vdwg.mxu0
    %v1194 = vrot.slane %v164, 6
    %v1195 = vrot.slane %v165, 5
    %v1196 = vsel %vm95, %v1195, %v1194
    %v1197 = vsel %vm97, %v1196, 0
    %1199 = vmatpush.msra.mxu0 0.0
    %1200 = vmatpush.msra.mxu0 0.0
    %1201 = vmatpush.msra.mxu0 0.0
    %1202 = vmatpush.msra.mxu0 0.0
    %1203 = vmatpush.msra.mxu0 0.0
    %1204 = vmatpush.msra.mxu0 0.0
    %1205 = vmatpush.msra.mxu0 0.0
    %1206 = vmatpush.msra.mxu0 0.0
    %1207 = vmatpush.msra.mxu0 0.0
    %1208 = vmatpush.msra.mxu0 0.0
    %1209 = vmatpush.msra.mxu0 0.0
    %1210 = vmatpush.msra.mxu0 0.0
    %1211 = vmatpush.msra.mxu0 0.0
    %1212 = vmatpush.msra.mxu0 0.0
    %1213 = vmatpush.msra.mxu0 0.0
    %1214 = vmatpush.msra.mxu0 %v202
    %1215 = vmatmul.f32.gmra.mxu0 %v1197
    %v1216 = vpop.f32.mrf.mxu0
    %v1217 = vadd.f32 %v1192, %v1216
    %1218 = vdwg.mxu0
    %1220 = vrot.lane.b32.xlu0 %v1168, 96
    %v1221 = vpop.permute.xlu0 %1220
    %v1222 = vsel %vm224, %v1221, 0
    %1224 = vmatpush.msra.mxu0 0.0
    %1225 = vmatpush.msra.mxu0 0.0
    %1226 = vmatpush.msra.mxu0 0.0
    %1227 = vmatpush.msra.mxu0 0.0
    %1228 = vmatpush.msra.mxu0 0.0
    %1229 = vmatpush.msra.mxu0 0.0
    %1230 = vmatpush.msra.mxu0 0.0
    %1231 = vmatpush.msra.mxu0 0.0
    %1232 = vmatpush.msra.mxu0 0.0
    %1233 = vmatpush.msra.mxu0 0.0
    %1234 = vmatpush.msra.mxu0 0.0
    %1235 = vmatpush.msra.mxu0 0.0
    %1236 = vmatpush.msra.mxu0 %v81
    %1237 = vmatpush.msra.mxu0 %v80
    %1238 = vmatpush.msra.mxu0 %v79
    %1239 = vmatpush.msra.mxu0 %v78
    %1240 = vmatmul.f32.gmra.mxu0 %v1222
    %v1241 = vpop.f32.mrf.mxu0
    %v1242 = vadd.f32 0.0, %v1241
    %1243 = vdwg.mxu0
    %v1244 = vadd.f32 %v1217, %v1242
    %v1245 = vadd.f32 %v1244, %v250
    %1246 = vmatpush.msra.mxu0 0.0
    %1247 = vmatpush.msra.mxu0 0.0
    %1248 = vmatpush.msra.mxu0 0.0
    %1249 = vmatpush.msra.mxu0 0.0
    %1250 = vmatpush.msra.mxu0 0.0
    %1251 = vmatpush.msra.mxu0 0.0
    %1252 = vmatpush.msra.mxu0 0.0
    %1253 = vmatpush.msra.mxu0 0.0
    %1254 = vmatpush.msra.mxu0 0.0
    %1255 = vmatpush.msra.mxu0 0.0
    %1256 = vmatpush.msra.mxu0 0.0
    %1257 = vmatpush.msra.mxu0 0.0
    %1258 = vmatpush.msra.mxu0 %v86
    %1259 = vmatpush.msra.mxu0 %v85
    %1260 = vmatpush.msra.mxu0 %v84
    %1261 = vmatpush.msra.mxu0 %v83
    %1262 = vmatmul.f32.gmra.mxu0 %v1222
    %v1263 = vpop.f32.mrf.mxu0
    %v1264 = vadd.f32 %v254, %v1263
    %1265 = vdwg.mxu0
    %v1266 = vxor.u32 %v1245, 2147483648
    %v1267 = vmul.f32 %v1266, 1.442695
    %v1268 = vpow.pop %v1267
    %v1269 = vadd.f32 %v1268, 1.0
    %v1270 = vrcp.pop %v1269
    %v1271 = vmul.f32 %v1269, %v1270
    %v1272 = vsub.f32 1.0, %v1271
    %v1273 = vmul.f32 %v1270, %v1272
    %v1274 = vadd.f32 %v1270, %v1273
    %vm1275 = vweird.f32 %v1269
    %vm1276 = vweird.f32 %v1270
    %vm1277 = vmor %vm1275, %vm1276
    %v1278 = vsel %vm1277, %v1270, %v1274
    %v1279 = vand.u32 2147483647, %v1269
    %vm1280 = vcmp.eq.f32.partialorder %v1279, 8.507059e+37
    %v1281 = vand.u32 %v1269, 2147483648
    %v1282 = vor.u32 1.1754944e-38, %v1281
    %v1283 = vsel %vm1280, %v1282, %v1278
    %v1284 = vmul.f32 1.0, %v1283
    %v1285 = vmul.f32 %v1284, %v1264
    %1287 = vrot.lane.b32.xlu0 %v1285, 64
    %v1288 = vpop.permute.xlu0 %1287
    %v1290 = vadd.f32 %v1245, %v1288
    %v1291 = vtanh.pop %v1290
    %v1292 = vsub.f32 1.0, %v1284
    %1294 = vrot.lane.b32.xlu0 %v1291, 96
    %v1295 = vpop.permute.xlu0 %1294
    %v1297 = vmul.f32 %v1292, %v1295
    %v1298 = vmul.f32 %v1284, %v1168
    %v1299 = vadd.f32 %v1297, %v1298
    %v1300 = vrot.slane %v67, 7
    %v1301 = vrot.slane %v68, 6
    %v1302 = vsel %vm95, %v1301, %v1300
    %v1303 = vsel %vm97, %v1302, 0
    %1305 = vmatpush.msra.mxu0 0.0
    %1306 = vmatpush.msra.mxu0 0.0
    %1307 = vmatpush.msra.mxu0 0.0
    %1308 = vmatpush.msra.mxu0 0.0
    %1309 = vmatpush.msra.mxu0 0.0
    %1310 = vmatpush.msra.mxu0 0.0
    %1311 = vmatpush.msra.mxu0 0.0
    %1312 = vmatpush.msra.mxu0 0.0
    %1313 = vmatpush.msra.mxu0 0.0
    %1314 = vmatpush.msra.mxu0 0.0
    %1315 = vmatpush.msra.mxu0 0.0
    %1316 = vmatpush.msra.mxu0 0.0
    %1317 = vmatpush.msra.mxu0 0.0
    %1318 = vmatpush.msra.mxu0 0.0
    %1319 = vmatpush.msra.mxu0 0.0
    %1320 = vmatpush.msra.mxu0 %v102
    %1321 = vmatmul.f32.gmra.mxu0 %v1303
    %v1322 = vpop.f32.mrf.mxu0
    %v1323 = vadd.f32 %v90, %v1322
    %1324 = vdwg.mxu0
    %v1325 = vmax.f32 %v1323, 0.0
    %v1326 = vsub.f32 0.0, %v1325
    %v1327 = vmul.f32 %v1326, 1.442695
    %v1328 = vpow.pop %v1327
    %1330 = vrot.lane.b32.xlu0 %v1328, 32
    %v1331 = vpop.permute.xlu0 %1330
    %v1333 = vmul.f32 %v1299, %v1331
    %v1334 = vrot.slane %v65, 7
    %v1335 = vrot.slane %v66, 6
    %v1336 = vsel %vm95, %v1335, %v1334
    %v1337 = vsel %vm97, %v1336, 0
    %1339 = vmatpush.msra.mxu0 0.0
    %1340 = vmatpush.msra.mxu0 0.0
    %1341 = vmatpush.msra.mxu0 0.0
    %1342 = vmatpush.msra.mxu0 0.0
    %1343 = vmatpush.msra.mxu0 0.0
    %1344 = vmatpush.msra.mxu0 0.0
    %1345 = vmatpush.msra.mxu0 0.0
    %1346 = vmatpush.msra.mxu0 0.0
    %1347 = vmatpush.msra.mxu0 0.0
    %1348 = vmatpush.msra.mxu0 0.0
    %1349 = vmatpush.msra.mxu0 0.0
    %1350 = vmatpush.msra.mxu0 0.0
    %1351 = vmatpush.msra.mxu0 0.0
    %1352 = vmatpush.msra.mxu0 0.0
    %1353 = vmatpush.msra.mxu0 0.0
    %1354 = vmatpush.msra.mxu0 %v173
    %1355 = vmatmul.f32.gmra.mxu0 %v1337
    %v1356 = vpop.f32.mrf.mxu0
    %v1357 = vadd.f32 0.0, %v1356
    %1358 = vdwg.mxu0
    %v1359 = vrot.slane %v164, 7
    %v1360 = vrot.slane %v165, 6
    %v1361 = vsel %vm95, %v1360, %v1359
    %v1362 = vsel %vm97, %v1361, 0
    %1364 = vmatpush.msra.mxu0 0.0
    %1365 = vmatpush.msra.mxu0 0.0
    %1366 = vmatpush.msra.mxu0 0.0
    %1367 = vmatpush.msra.mxu0 0.0
    %1368 = vmatpush.msra.mxu0 0.0
    %1369 = vmatpush.msra.mxu0 0.0
    %1370 = vmatpush.msra.mxu0 0.0
    %1371 = vmatpush.msra.mxu0 0.0
    %1372 = vmatpush.msra.mxu0 0.0
    %1373 = vmatpush.msra.mxu0 0.0
    %1374 = vmatpush.msra.mxu0 0.0
    %1375 = vmatpush.msra.mxu0 0.0
    %1376 = vmatpush.msra.mxu0 0.0
    %1377 = vmatpush.msra.mxu0 0.0
    %1378 = vmatpush.msra.mxu0 0.0
    %1379 = vmatpush.msra.mxu0 %v202
    %1380 = vmatmul.f32.gmra.mxu0 %v1362
    %v1381 = vpop.f32.mrf.mxu0
    %v1382 = vadd.f32 %v1357, %v1381
    %1383 = vdwg.mxu0
    %1385 = vrot.lane.b32.xlu0 %v1333, 96
    %v1386 = vpop.permute.xlu0 %1385
    %v1387 = vsel %vm224, %v1386, 0
    %1389 = vmatpush.msra.mxu0 0.0
    %1390 = vmatpush.msra.mxu0 0.0
    %1391 = vmatpush.msra.mxu0 0.0
    %1392 = vmatpush.msra.mxu0 0.0
    %1393 = vmatpush.msra.mxu0 0.0
    %1394 = vmatpush.msra.mxu0 0.0
    %1395 = vmatpush.msra.mxu0 0.0
    %1396 = vmatpush.msra.mxu0 0.0
    %1397 = vmatpush.msra.mxu0 0.0
    %1398 = vmatpush.msra.mxu0 0.0
    %1399 = vmatpush.msra.mxu0 0.0
    %1400 = vmatpush.msra.mxu0 0.0
    %1401 = vmatpush.msra.mxu0 %v81
    %1402 = vmatpush.msra.mxu0 %v80
    %1403 = vmatpush.msra.mxu0 %v79
    %1404 = vmatpush.msra.mxu0 %v78
    %1405 = vmatmul.f32.gmra.mxu0 %v1387
    %v1406 = vpop.f32.mrf.mxu0
    %v1407 = vadd.f32 0.0, %v1406
    %1408 = vdwg.mxu0
    %v1409 = vadd.f32 %v1382, %v1407
    %v1410 = vadd.f32 %v1409, %v250
    %1411 = vmatpush.msra.mxu0 0.0
    %1412 = vmatpush.msra.mxu0 0.0
    %1413 = vmatpush.msra.mxu0 0.0
    %1414 = vmatpush.msra.mxu0 0.0
    %1415 = vmatpush.msra.mxu0 0.0
    %1416 = vmatpush.msra.mxu0 0.0
    %1417 = vmatpush.msra.mxu0 0.0
    %1418 = vmatpush.msra.mxu0 0.0
    %1419 = vmatpush.msra.mxu0 0.0
    %1420 = vmatpush.msra.mxu0 0.0
    %1421 = vmatpush.msra.mxu0 0.0
    %1422 = vmatpush.msra.mxu0 0.0
    %1423 = vmatpush.msra.mxu0 %v86
    %1424 = vmatpush.msra.mxu0 %v85
    %1425 = vmatpush.msra.mxu0 %v84
    %1426 = vmatpush.msra.mxu0 %v83
    %1427 = vmatmul.f32.gmra.mxu0 %v1387
    %v1428 = vpop.f32.mrf.mxu0
    %v1429 = vadd.f32 %v254, %v1428
    %1430 = vdwg.mxu0
    %v1431 = vxor.u32 %v1410, 2147483648
    %v1432 = vmul.f32 %v1431, 1.442695
    %v1433 = vpow.pop %v1432
    %v1434 = vadd.f32 %v1433, 1.0
    %v1435 = vrcp.pop %v1434
    %v1436 = vmul.f32 %v1434, %v1435
    %v1437 = vsub.f32 1.0, %v1436
    %v1438 = vmul.f32 %v1435, %v1437
    %v1439 = vadd.f32 %v1435, %v1438
    %vm1440 = vweird.f32 %v1434
    %vm1441 = vweird.f32 %v1435
    %vm1442 = vmor %vm1440, %vm1441
    %v1443 = vsel %vm1442, %v1435, %v1439
    %v1444 = vand.u32 2147483647, %v1434
    %vm1445 = vcmp.eq.f32.partialorder %v1444, 8.507059e+37
    %v1446 = vand.u32 %v1434, 2147483648
    %v1447 = vor.u32 1.1754944e-38, %v1446
    %v1448 = vsel %vm1445, %v1447, %v1443
    %v1449 = vmul.f32 1.0, %v1448
    %v1450 = vmul.f32 %v1449, %v1429
    %1452 = vrot.lane.b32.xlu0 %v1450, 64
    %v1453 = vpop.permute.xlu0 %1452
    %v1455 = vadd.f32 %v1410, %v1453
    %v1456 = vtanh.pop %v1455
    %v1457 = vsub.f32 1.0, %v1449
    %1459 = vrot.lane.b32.xlu0 %v1456, 96
    %v1460 = vpop.permute.xlu0 %1459
    %v1462 = vmul.f32 %v1457, %v1460
    %v1463 = vmul.f32 %v1449, %v1333
    %v1464 = vadd.f32 %v1462, %v1463
    %1466 = vrot.lane.b32.xlu0 %v1464, 96
    %v1467 = vpop.permute.xlu0 %1466
    %vm1469 = vcmask 254976
    %1470 = vst.msk [vmem:[#allocation2] sm:$0x3] %vm1469, %v1467
    // Predicated region
    $region74: #{tpu_custom_call.1} parent=1 // pred_check
      %p1471 = pneg %p57
    $region75: #{tpu_custom_call.1} parent=1 // pred_check_branch
      %1473 = sbr.rel (%p1471) target = $region77
    $region76: #{tpu_custom_call.1} parent=1 // pred_region
      %v1474 = vld [vmem:[%s15] sm:$0xff]
      %v1475 = vld [vmem:[%s15 + $0x8] sm:$0xff]
      %v1476 = vld [vmem:[%s15 + $0x10] sm:$0xff]
      %v1477 = vld [vmem:[%s15 + $0x18] sm:$0xff]
      %v1478 = vld [vmem:[%s16] sm:$0x1]
      %v1480 = vperm.slane %v1478, 0
      %v1482 = vsel %vm224, %v1467, 0
      %1484 = vmatpush.msra.mxu0 0.0
      %1485 = vmatpush.msra.mxu0 0.0
      %1486 = vmatpush.msra.mxu0 0.0
      %1487 = vmatpush.msra.mxu0 0.0
      %1488 = vmatpush.msra.mxu0 0.0
      %1489 = vmatpush.msra.mxu0 0.0
      %1490 = vmatpush.msra.mxu0 0.0
      %1491 = vmatpush.msra.mxu0 0.0
      %1492 = vmatpush.msra.mxu0 0.0
      %1493 = vmatpush.msra.mxu0 0.0
      %1494 = vmatpush.msra.mxu0 0.0
      %1495 = vmatpush.msra.mxu0 0.0
      %1496 = vmatpush.msra.mxu0 %v1477
      %1497 = vmatpush.msra.mxu0 %v1476
      %1498 = vmatpush.msra.mxu0 %v1475
      %1499 = vmatpush.msra.mxu0 %v1474
      %1500 = vmatmul.f32.gmra.mxu0 %v1482
      %v1501 = vpop.f32.mrf.mxu0
      %v1502 = vadd.f32 %v1480, %v1501
      %1503 = vdwg.mxu0
      %v1504 = vxor.u32 %v1502, 2147483648
      %v1505 = vmul.f32 %v1504, 1.442695
      %v1506 = vpow.pop %v1505
      %v1507 = vadd.f32 %v1506, 1.0
      %v1508 = vrcp.pop %v1507
      %v1509 = vmul.f32 %v1507, %v1508
      %v1510 = vsub.f32 1.0, %v1509
      %v1511 = vmul.f32 %v1508, %v1510
      %v1512 = vadd.f32 %v1508, %v1511
      %vm1513 = vweird.f32 %v1507
      %vm1514 = vweird.f32 %v1508
      %vm1515 = vmor %vm1513, %vm1514
      %v1516 = vsel %vm1515, %v1508, %v1512
      %v1517 = vand.u32 2147483647, %v1507
      %vm1518 = vcmp.eq.f32.partialorder %v1517, 8.507059e+37
      %v1519 = vand.u32 %v1507, 2147483648
      %v1520 = vor.u32 1.1754944e-38, %v1519
      %v1521 = vsel %vm1518, %v1520, %v1516
      %v1522 = vmul.f32 1.0, %v1521
      %vm1523 = vcmask 9216
      %1524 = vst.msk [vmem:[#allocation3] sm:$0x3] %vm1523, %v1522
    $region77: #{tpu_custom_call.1} parent=1 // pred_fallthru
      _
    // Predicated region
    $region78: #{tpu_custom_call.1} parent=1 // pred_check
      _
    $region79: #{tpu_custom_call.1} parent=1 // pred_check_branch
      %1526 = sbr.rel (0) target = $region81
    $region80: #{tpu_custom_call.1} parent=1 // pred_region
      %1528 = vsyncadd [#allocation4], 0
      %s1530 = sshll.u32 [#allocation3], 4
      %s1531 = int_to_ptr.vmem [resolvable:$true] %s1530
      %s1532 = sshll.u32 %s17, 4
      %s1533 = int_to_ptr.hbm [resolvable:$true] %s1532
      %1535 = dma.vmem_to_hbm [thread:$0]  %s1531, 32, %s1533, [#allocation4]
    $region81: #{tpu_custom_call.1} parent=1 // pred_fallthru
      _
    // Predicated region
    $region82: #{tpu_custom_call.1} parent=1 // pred_check
      _
    $region83: #{tpu_custom_call.1} parent=1 // pred_check_branch
      %1537 = sbr.rel (0) target = $region85
    $region84: #{tpu_custom_call.1} parent=1 // pred_region
      %1539 = dma.done [#allocation4], 32
    $region85: #{tpu_custom_call.1} parent=1 // pred_fallthru
      _
    %1540 = vsyncpa [#allocation4], 1

</llo_original>
